<compile_context>
chip_gen: v6e
topology: v6e:2x2x1
jax: 0.10.0
libtpu: 0.0.40
codegen_flags: <defaults>
</compile_context>

<pallas_src>
import functools
import math

import jax
import jax.numpy as jnp
from jax import lax
from jax.experimental import pallas as pl
from jax.experimental.pallas import tpu as pltpu


# ----------------------------------------------------------------------------
# Fused kernel: expand(1x1)+BN+ReLU -> dw(3x3)+BN+ReLU -> project(1x1)+BN(+res)
# All activations are lane-packed: lane index = column * planes + channel.
# ----------------------------------------------------------------------------
def _fused_block_kernel(x_ref, w1_ref, s1_ref, b1_ref, w2_ref, s2_ref, b2_ref,
                        w3_ref, s3_ref, b3_ref, *rest,
                        stride, shortcut, h, th_o, th_in, planes, cf):
    if shortcut:
        res_ref, o_ref = rest
    else:
        (o_ref,) = rest

    t = pl.program_id(1)
    row0 = pl.multiple_of(t * (th_o * stride), th_o * stride)

    # --- 1) expand 1x1 as a block-diagonal matmul (MXU, bf16 in / f32 acc) + BN1 + ReLU
    xr = x_ref[0, pl.ds(row0, th_in), :].astype(jnp.bfloat16)   # (th_in, wpad*cin)
    z = jnp.dot(xr, w1_ref[...], preferred_element_type=jnp.float32)  # (th_in, wpad*planes)
    z = jnp.maximum(z * s1_ref[...] + b1_ref[...], 0.0)
    # Zero the TOP/BOTTOM conv2 padding rows (padding is applied post-ReLU in the
    # reference). Left/right pad columns are already exactly zero because the packed
    # BN1 scale/bias are zeroed on those lanes at pack time.
    rows = row0 + lax.broadcasted_iota(jnp.int32, (th_in, 1), 0)
    z = jnp.where((rows >= 1) & (rows <= h), z, 0.0)

    # --- 2) depthwise 3x3 (VPU, dense lanes) + BN2 + ReLU -----------------------------
    cfp = cf * planes
    span = stride * (th_o - 1) + 1
    acc = jnp.zeros((th_o, cfp), jnp.float32)
    for kw in range(3):
        # column tap: a static lane shift of the packed activation (XLU work only)
        zk = z[:, kw * planes: kw * planes + cfp]               # (th_in, cf*planes)
        for kh in range(3):
            k = kh * 3 + kw
            wk = w2_ref[k:k + 1, :]                             # (1, cf*planes)
            acc = acc + zk[kh:kh + span:stride, :] * wk
    dw = jnp.maximum(acc * s2_ref[...] + b2_ref[...], 0.0)

    # --- 3) project 1x1 as a block-diagonal matmul + BN3 (+ residual), one dense store
    y = jnp.dot(dw.astype(jnp.bfloat16), w3_ref[...],
                preferred_element_type=jnp.float32)             # (th_o, wo*cout)
    y = y * s3_ref[...] + b3_ref[...]
    if shortcut:
        y = y + res_ref[0]                                      # single slab add
    o_ref[0] = y.astype(o_ref.dtype)                            # single lane-dense store


# ----------------------------------------------------------------------------
# Wrapper
# ----------------------------------------------------------------------------
def _row_tile(ho):
    for t in (32, 24, 16, 8):
        if ho % t == 0:
            return t
    return ho


@functools.partial(jax.jit, static_argnames=("stride", "shortcut"))
def block_forward(x_nchw, packed, *, stride, shortcut):
    """Full Block forward. Input/output in NCHW (PyTorch convention)."""
    x = jnp.transpose(x_nchw, (0, 2, 3, 1))                     # -> NHWC (small tensor)
    n, h, w, cin = x.shape

    ho = (h + 2 - 3) // stride + 1
    wo = (w + 2 - 3) // stride + 1
    cf = stride * (wo - 1) + 1                                  # full-res dw columns
    planes = packed["s2"].shape[1] // cf
    cout = packed["s3"].shape[1] // wo
    wpad = packed["w1"].shape[1] // planes
    assert packed["w1"].shape[0] == wpad * cin, "packed params do not match input shape"
    if shortcut:
        assert stride == 1 and cin == cout

    th_o = _row_tile(ho)                                        # output rows per step
    th_in = stride * (th_o - 1) + 3                             # input rows incl. halo
    nt = ho // th_o

    # pad: 1 ring pixel for conv2 + right columns up to the lane-aligned wpad (zeros)
    xp = jnp.pad(x, ((0, 0), (1, 1), (1, wpad - w - 1), (0, 0)))
    xp_flat = xp.reshape(n, h + 2, wpad * cin)                  # lane-packed input
    x_res = x.reshape(n, h, w * cin)                            # lane-dense residual view

    kernel = functools.partial(
        _fused_block_kernel, stride=stride, shortcut=shortcut,
        h=h, th_o=th_o, th_in=th_in, planes=planes, cf=cf)

    in_specs = [
        pl.BlockSpec((1, h + 2, wpad * cin), lambda b, t: (b, 0, 0)),  # padded input
        pl.BlockSpec(packed["w1"].shape, lambda b, t: (0, 0)),         # W1 block-diag (bf16)
        pl.BlockSpec(packed["s1"].shape, lambda b, t: (0, 0)),
        pl.BlockSpec(packed["b1"].shape, lambda b, t: (0, 0)),
        pl.BlockSpec(packed["w2"].shape, lambda b, t: (0, 0)),         # dw taps, tiled (f32)
        pl.BlockSpec(packed["s2"].shape, lambda b, t: (0, 0)),
        pl.BlockSpec(packed["b2"].shape, lambda b, t: (0, 0)),
        pl.BlockSpec(packed["w3"].shape, lambda b, t: (0, 0)),         # W3 block-diag (bf16)
        pl.BlockSpec(packed["s3"].shape, lambda b, t: (0, 0)),
        pl.BlockSpec(packed["b3"].shape, lambda b, t: (0, 0)),
    ]
    args = [xp_flat, packed["w1"], packed["s1"], packed["b1"],
            packed["w2"], packed["s2"], packed["b2"],
            packed["w3"], packed["s3"], packed["b3"]]
    if shortcut:
        in_specs.append(pl.BlockSpec((1, th_o, w * cin), lambda b, t: (b, t, 0)))
        args.append(x_res)

    out_flat = pl.pallas_call(
        kernel,
        out_shape=jax.ShapeDtypeStruct((n, ho, wo * cout), jnp.float32),
        grid=(n, nt),
        in_specs=in_specs,
        out_specs=pl.BlockSpec((1, th_o, wo * cout), lambda b, t: (b, t, 0)),
        compiler_params=pltpu.CompilerParams(
            # NOTE: on v7x, pltpu.CORE_PARALLEL on the batch axis would shard the two
            # TensorCores explicitly; plain "parallel" is kept for portability.
            dimension_semantics=("parallel", "parallel"),
            vmem_limit_bytes=8 * 1024 * 1024),
    )(*args)

    out = out_flat.reshape(n, ho, wo, cout)
    return jnp.transpose(out, (0, 3, 1, 2))                     # -> NCHW


# ----------------------------------------------------------------------------
# Parameter init / packing (BN folded to inference-form scale/bias)
# ----------------------------------------------------------------------------
def fold_bn(gamma, beta, mean, var, eps=1e-5):
    scale = gamma / jnp.sqrt(var + eps)
    bias = beta - mean * scale
    return scale, bias


def make_params(key, in_planes, out_planes, expansion):
    planes = expansion * in_planes
    ks = jax.random.split(key, 15)

    def bn(k0, k1, k2, k3, c):
        gamma = jax.random.uniform(k0, (c,), jnp.float32, 0.5, 1.5)
        beta = 0.1 * jax.random.normal(k1, (c,), jnp.float32)
        mean = 0.1 * jax.random.normal(k2, (c,), jnp.float32)
        var = jax.random.uniform(k3, (c,), jnp.float32, 0.5, 1.5)
        return fold_bn(gamma, beta, mean, var)

    w1 = 0.2 * jax.random.normal(ks[0], (in_planes, planes), jnp.float32)   # 1x1
    w2 = 0.2 * jax.random.normal(ks[1], (3, 3, planes), jnp.float32)        # depthwise
    w3 = 0.2 * jax.random.normal(ks[2], (planes, out_planes), jnp.float32)  # 1x1
    s1, b1 = bn(ks[3], ks[4], ks[5], ks[6], planes)
    s2, b2 = bn(ks[7], ks[8], ks[9], ks[10], planes)
    s3, b3 = bn(ks[11], ks[12], ks[13], ks[14], out_planes)
    return dict(w1=w1, w2=w2, w3=w3, s1=s1, b1=b1, s2=s2, b2=b2, s3=s3, b3=b3)


def pack_block_params(params, *, h, w, stride):
    """One-time prep for the lane-packed fused kernel (small-channel fast path).

    Builds block-diagonal 1x1 weights operating on the (column*planes + channel)
    lane-packed layout, tiles the depthwise taps / folded-BN vectors over columns,
    zeroes the BN1 constants on the conv2 padding-ring columns, and folds the
    stride-2 column decimation into the project weights. 1x1 weights are cast to
    bf16 for the MXU.
    """
    w1, w2, w3 = params["w1"], params["w2"], params["w3"]
    cin, planes = w1.shape
    cout = w3.shape[1]
    wo = (w + 2 - 3) // stride + 1
    cf = stride * (wo - 1) + 1
    # pad the (w+2) columns so the packed lane width is a multiple of 128
    m = 128 // math.gcd(planes, 128)
    wpad = -(-(w + 2) // m) * m

    # expand: block-diagonal (wpad*cin, wpad*planes)
    eye = jnp.eye(wpad, dtype=jnp.float32)
    w1b = jnp.einsum("cd,ip->cidp", eye, w1).reshape(wpad * cin, wpad * planes)
    # BN1 scale/bias tiled per column; zeroed on the padding-ring / alignment columns
    # so the packed expanded activation is exactly 0 there (padding applied post-ReLU).
    cmask = ((jnp.arange(wpad) >= 1) & (jnp.arange(wpad) <= w)).astype(jnp.float32)
    s1t = (cmask[:, None] * params["s1"][None, :]).reshape(1, wpad * planes)
    b1t = (cmask[:, None] * params["b1"][None, :]).reshape(1, wpad * planes)

    # depthwise taps / BN2 tiled over the cf full-resolution columns
    w2t = jnp.tile(w2.reshape(9, 1, planes), (1, cf, 1)).reshape(9, cf * planes)
    s2t = jnp.tile(params["s2"], cf).reshape(1, cf * planes)
    b2t = jnp.tile(params["b2"], cf).reshape(1, cf * planes)

    # project: block-diagonal, selecting the strided source columns
    sel = (jnp.arange(cf)[:, None] == stride * jnp.arange(wo)[None, :]).astype(jnp.float32)
    w3b = jnp.einsum("fc,po->fpco", sel, w3).reshape(cf * planes, wo * cout)
    s3t = jnp.tile(params["s3"], wo).reshape(1, wo * cout)
    b3t = jnp.tile(params["b3"], wo).reshape(1, wo * cout)

    return dict(w1=w1b.astype(jnp.bfloat16), s1=s1t, b1=b1t,
                w2=w2t, s2=s2t, b2=b2t,
                w3=w3b.astype(jnp.bfloat16), s3=s3t, b3=b3t)


# ----------------------------------------------------------------------------
# Pure-JAX reference (mirrors the kernel's bf16-in / f32-accumulate 1x1 matmuls)
# ----------------------------------------------------------------------------
def reference_forward(x_nchw, params, *, stride, shortcut):
    x = jnp.transpose(x_nchw, (0, 2, 3, 1))
    dn = ("NHWC", "HWIO", "NHWC")
    planes = params["w1"].shape[1]

    w1 = params["w1"].astype(jnp.bfloat16).reshape(1, 1, *params["w1"].shape)
    out = lax.conv_general_dilated(x.astype(jnp.bfloat16), w1, (1, 1), "VALID",
                                   dimension_numbers=dn,
                                   preferred_element_type=jnp.float32)
    out = jnp.maximum(out * params["s1"] + params["b1"], 0.0)

    w2 = params["w2"].reshape(3, 3, 1, planes)
    out = lax.conv_general_dilated(out, w2, (stride, stride), ((1, 1), (1, 1)),
                                   dimension_numbers=dn,
                                   feature_group_count=planes)
    out = jnp.maximum(out * params["s2"] + params["b2"], 0.0)

    w3 = params["w3"].astype(jnp.bfloat16).reshape(1, 1, *params["w3"].shape)
    out = lax.conv_general_dilated(out.astype(jnp.bfloat16), w3, (1, 1), "VALID",
                                   dimension_numbers=dn,
                                   preferred_element_type=jnp.float32)
    out = out * params["s3"] + params["b3"]
    if shortcut:
        out = out + x
    return jnp.transpose(out, (0, 3, 1, 2))


# ----------------------------------------------------------------------------
if __name__ == "__main__":
    # Block(in_planes=8, out_planes=8, expansion=2, stride=1) -> shortcut=True
    in_planes, out_planes, expansion, stride = 8, 8, 2, 1
    shortcut = (stride == 1 and in_planes == out_planes)
    H = W = 16

    key = jax.random.PRNGKey(0)
    kx, kp = jax.random.split(key)
    x = jax.random.normal(kx, (2, in_planes, H, W), jnp.float32)  # NCHW
    params = make_params(kp, in_planes, out_planes, expansion)
    packed = pack_block_params(params, h=H, w=W, stride=stride)

    out = block_forward(x, packed, stride=stride, shortcut=shortcut)
    out = jax.block_until_ready(out)

    ref = reference_forward(x, params, stride=stride, shortcut=shortcut)
    assert out.shape == ref.shape == (2, out_planes, H, W)
    # Tolerance accounts for bf16 MXU inputs (f32 accumulation) in both paths.
    assert jnp.allclose(out, ref, atol=2e-2, rtol=2e-2), "mismatch vs reference"

    print("KERNEL_OK")
</pallas_src>

<mosaic_0001>
module attributes {stable_mosaic.version = 11 : i64} {
  func.func @_fused_block_kernel(%arg0: i32, %arg1: i32, %arg2: memref<1x18x192xf32, #tpu.memory_space<vmem>>, %arg3: memref<192x384xbf16, #tpu.memory_space<vmem>>, %arg4: memref<1x384xf32, #tpu.memory_space<vmem>>, %arg5: memref<1x384xf32, #tpu.memory_space<vmem>>, %arg6: memref<9x256xf32, #tpu.memory_space<vmem>>, %arg7: memref<1x256xf32, #tpu.memory_space<vmem>>, %arg8: memref<1x256xf32, #tpu.memory_space<vmem>>, %arg9: memref<256x128xbf16, #tpu.memory_space<vmem>>, %arg10: memref<1x128xf32, #tpu.memory_space<vmem>>, %arg11: memref<1x128xf32, #tpu.memory_space<vmem>>, %arg12: memref<1x16x128xf32, #tpu.memory_space<vmem>>, %arg13: memref<1x16x128xf32, #tpu.memory_space<vmem>>) attributes {dimension_semantics = [#tpu.dimension_semantics<parallel>, #tpu.dimension_semantics<parallel>], iteration_bounds = array<i64: 2, 1>, scalar_prefetch = 0 : i64, scratch_operands = 0 : i64, tpu.core_type = #tpu.core_type<tc>, window_params = [{transform_indices = @transform_0, window_bounds = array<i64: 1, 18, 192>}, {pipeline_mode = #tpu.pipeline_mode<synchronous>, transform_indices = @transform_1, window_bounds = array<i64: 192, 384>}, {pipeline_mode = #tpu.pipeline_mode<synchronous>, transform_indices = @transform_2, window_bounds = array<i64: 1, 384>}, {pipeline_mode = #tpu.pipeline_mode<synchronous>, transform_indices = @transform_3, window_bounds = array<i64: 1, 384>}, {pipeline_mode = #tpu.pipeline_mode<synchronous>, transform_indices = @transform_4, window_bounds = array<i64: 9, 256>}, {pipeline_mode = #tpu.pipeline_mode<synchronous>, transform_indices = @transform_5, window_bounds = array<i64: 1, 256>}, {pipeline_mode = #tpu.pipeline_mode<synchronous>, transform_indices = @transform_6, window_bounds = array<i64: 1, 256>}, {pipeline_mode = #tpu.pipeline_mode<synchronous>, transform_indices = @transform_7, window_bounds = array<i64: 256, 128>}, {pipeline_mode = #tpu.pipeline_mode<synchronous>, transform_indices = @transform_8, window_bounds = array<i64: 1, 128>}, {pipeline_mode = #tpu.pipeline_mode<synchronous>, transform_indices = @transform_9, window_bounds = array<i64: 1, 128>}, {transform_indices = @transform_10, window_bounds = array<i64: 1, 16, 128>}, {transform_indices = @transform_11, window_bounds = array<i64: 1, 16, 128>}]} {
    %c16_i32 = arith.constant 16 : i32
    %0 = arith.muli %arg1, %c16_i32 : i32
    %1 = tpu.assume_multiple %0, 16 : i32
    %c0 = arith.constant 0 : index
    %2 = arith.index_cast %1 : i32 to index
    %c0_0 = arith.constant 0 : index
    %3 = vector.load %arg2[%c0, %2, %c0_0] : memref<1x18x192xf32, #tpu.memory_space<vmem>>, vector<1x18x192xf32>
    %4 = vector.shape_cast %3 : vector<1x18x192xf32> to vector<18x192xf32>
    %5 = arith.truncf %4 : vector<18x192xf32> to vector<18x192xbf16>
    %c0_1 = arith.constant 0 : index
    %c0_2 = arith.constant 0 : index
    %6 = vector.load %arg3[%c0_1, %c0_2] : memref<192x384xbf16, #tpu.memory_space<vmem>>, vector<192x384xbf16>
    %cst = arith.constant dense<0.000000e+00> : vector<18x384xf32>
    %7 = tpu.matmul %5, %6, %cst {dimension_numbers = #tpu.dot_dimension_numbers<[1], [0], [0], [1], [0, 0, 1, 1], [], []>} : vector<18x192xbf16>, vector<192x384xbf16>, vector<18x384xf32> -> vector<18x384xf32>
    %c0_3 = arith.constant 0 : index
    %c0_4 = arith.constant 0 : index
    %8 = vector.load %arg4[%c0_3, %c0_4] : memref<1x384xf32, #tpu.memory_space<vmem>>, vector<1x384xf32>
    %9 = vector.broadcast %8 : vector<1x384xf32> to vector<18x384xf32>
    %10 = arith.mulf %7, %9 : vector<18x384xf32>
    %c0_5 = arith.constant 0 : index
    %c0_6 = arith.constant 0 : index
    %11 = vector.load %arg5[%c0_5, %c0_6] : memref<1x384xf32, #tpu.memory_space<vmem>>, vector<1x384xf32>
    %12 = vector.broadcast %11 : vector<1x384xf32> to vector<18x384xf32>
    %13 = arith.addf %10, %12 : vector<18x384xf32>
    %cst_7 = arith.constant 0.000000e+00 : f32
    %14 = vector.broadcast %cst_7 : f32 to vector<18x384xf32>
    %15 = arith.maximumf %13, %14 : vector<18x384xf32>
    %16 = tpu.iota {dimensions = array<i32: 0>} : vector<18x1xi32>
    %17 = vector.broadcast %1 : i32 to vector<18x1xi32>
    %18 = arith.addi %17, %16 : vector<18x1xi32>
    %c1_i32 = arith.constant 1 : i32
    %19 = vector.broadcast %c1_i32 : i32 to vector<18x1xi32>
    %20 = arith.cmpi sge, %18, %19 : vector<18x1xi32>
    %c16_i32_8 = arith.constant 16 : i32
    %21 = vector.broadcast %c16_i32_8 : i32 to vector<18x1xi32>
    %22 = arith.cmpi sle, %18, %21 : vector<18x1xi32>
    %23 = arith.andi %20, %22 : vector<18x1xi1>
    %cst_9 = arith.constant 0.000000e+00 : f32
    %24 = vector.shape_cast %23 : vector<18x1xi1> to vector<18x1xi1>
    %25 = vector.broadcast %24 : vector<18x1xi1> to vector<18x384xi1>
    %26 = vector.broadcast %cst_9 : f32 to vector<18x384xf32>
    %27 = arith.select %25, %15, %26 : vector<18x384xi1>, vector<18x384xf32>
    %cst_10 = arith.constant 0.000000e+00 : f32
    %28 = vector.broadcast %cst_10 : f32 to vector<16x256xf32>
    %29 = vector.extract_strided_slice %27 {offsets = [0, 0], sizes = [18, 256], strides = [1, 1]} : vector<18x384xf32> to vector<18x256xf32>
    %c0_11 = arith.constant 0 : index
    %c0_12 = arith.constant 0 : index
    %30 = vector.load %arg6[%c0_11, %c0_12] : memref<9x256xf32, #tpu.memory_space<vmem>>, vector<1x256xf32>
    %31 = vector.extract_strided_slice %29 {offsets = [0, 0], sizes = [16, 256], strides = [1, 1]} : vector<18x256xf32> to vector<16x256xf32>
    %32 = vector.broadcast %30 : vector<1x256xf32> to vector<16x256xf32>
    %33 = arith.mulf %31, %32 : vector<16x256xf32>
    %34 = arith.addf %28, %33 : vector<16x256xf32>
    %c3 = arith.constant 3 : index
    %c0_13 = arith.constant 0 : index
    %35 = vector.load %arg6[%c3, %c0_13] : memref<9x256xf32, #tpu.memory_space<vmem>>, vector<1x256xf32>
    %36 = vector.extract_strided_slice %29 {offsets = [1, 0], sizes = [16, 256], strides = [1, 1]} : vector<18x256xf32> to vector<16x256xf32>
    %37 = vector.broadcast %35 : vector<1x256xf32> to vector<16x256xf32>
    %38 = arith.mulf %36, %37 : vector<16x256xf32>
    %39 = arith.addf %34, %38 : vector<16x256xf32>
    %c6 = arith.constant 6 : index
    %c0_14 = arith.constant 0 : index
    %40 = vector.load %arg6[%c6, %c0_14] : memref<9x256xf32, #tpu.memory_space<vmem>>, vector<1x256xf32>
    %41 = vector.extract_strided_slice %29 {offsets = [2, 0], sizes = [16, 256], strides = [1, 1]} : vector<18x256xf32> to vector<16x256xf32>
    %42 = vector.broadcast %40 : vector<1x256xf32> to vector<16x256xf32>
    %43 = arith.mulf %41, %42 : vector<16x256xf32>
    %44 = arith.addf %39, %43 : vector<16x256xf32>
    %45 = vector.extract_strided_slice %27 {offsets = [0, 16], sizes = [18, 256], strides = [1, 1]} : vector<18x384xf32> to vector<18x256xf32>
    %c1 = arith.constant 1 : index
    %c0_15 = arith.constant 0 : index
    %46 = vector.load %arg6[%c1, %c0_15] : memref<9x256xf32, #tpu.memory_space<vmem>>, vector<1x256xf32>
    %47 = vector.extract_strided_slice %45 {offsets = [0, 0], sizes = [16, 256], strides = [1, 1]} : vector<18x256xf32> to vector<16x256xf32>
    %48 = vector.broadcast %46 : vector<1x256xf32> to vector<16x256xf32>
    %49 = arith.mulf %47, %48 : vector<16x256xf32>
    %50 = arith.addf %44, %49 : vector<16x256xf32>
    %c4 = arith.constant 4 : index
    %c0_16 = arith.constant 0 : index
    %51 = vector.load %arg6[%c4, %c0_16] : memref<9x256xf32, #tpu.memory_space<vmem>>, vector<1x256xf32>
    %52 = vector.extract_strided_slice %45 {offsets = [1, 0], sizes = [16, 256], strides = [1, 1]} : vector<18x256xf32> to vector<16x256xf32>
    %53 = vector.broadcast %51 : vector<1x256xf32> to vector<16x256xf32>
    %54 = arith.mulf %52, %53 : vector<16x256xf32>
    %55 = arith.addf %50, %54 : vector<16x256xf32>
    %c7 = arith.constant 7 : index
    %c0_17 = arith.constant 0 : index
    %56 = vector.load %arg6[%c7, %c0_17] : memref<9x256xf32, #tpu.memory_space<vmem>>, vector<1x256xf32>
    %57 = vector.extract_strided_slice %45 {offsets = [2, 0], sizes = [16, 256], strides = [1, 1]} : vector<18x256xf32> to vector<16x256xf32>
    %58 = vector.broadcast %56 : vector<1x256xf32> to vector<16x256xf32>
    %59 = arith.mulf %57, %58 : vector<16x256xf32>
    %60 = arith.addf %55, %59 : vector<16x256xf32>
    %61 = vector.extract_strided_slice %27 {offsets = [0, 32], sizes = [18, 256], strides = [1, 1]} : vector<18x384xf32> to vector<18x256xf32>
    %c2 = arith.constant 2 : index
    %c0_18 = arith.constant 0 : index
    %62 = vector.load %arg6[%c2, %c0_18] : memref<9x256xf32, #tpu.memory_space<vmem>>, vector<1x256xf32>
    %63 = vector.extract_strided_slice %61 {offsets = [0, 0], sizes = [16, 256], strides = [1, 1]} : vector<18x256xf32> to vector<16x256xf32>
    %64 = vector.broadcast %62 : vector<1x256xf32> to vector<16x256xf32>
    %65 = arith.mulf %63, %64 : vector<16x256xf32>
    %66 = arith.addf %60, %65 : vector<16x256xf32>
    %c5 = arith.constant 5 : index
    %c0_19 = arith.constant 0 : index
    %67 = vector.load %arg6[%c5, %c0_19] : memref<9x256xf32, #tpu.memory_space<vmem>>, vector<1x256xf32>
    %68 = vector.extract_strided_slice %61 {offsets = [1, 0], sizes = [16, 256], strides = [1, 1]} : vector<18x256xf32> to vector<16x256xf32>
    %69 = vector.broadcast %67 : vector<1x256xf32> to vector<16x256xf32>
    %70 = arith.mulf %68, %69 : vector<16x256xf32>
    %71 = arith.addf %66, %70 : vector<16x256xf32>
    %c8 = arith.constant 8 : index
    %c0_20 = arith.constant 0 : index
    %72 = vector.load %arg6[%c8, %c0_20] : memref<9x256xf32, #tpu.memory_space<vmem>>, vector<1x256xf32>
    %73 = vector.extract_strided_slice %61 {offsets = [2, 0], sizes = [16, 256], strides = [1, 1]} : vector<18x256xf32> to vector<16x256xf32>
    %74 = vector.broadcast %72 : vector<1x256xf32> to vector<16x256xf32>
    %75 = arith.mulf %73, %74 : vector<16x256xf32>
    %76 = arith.addf %71, %75 : vector<16x256xf32>
    %c0_21 = arith.constant 0 : index
    %c0_22 = arith.constant 0 : index
    %77 = vector.load %arg7[%c0_21, %c0_22] : memref<1x256xf32, #tpu.memory_space<vmem>>, vector<1x256xf32>
    %78 = vector.broadcast %77 : vector<1x256xf32> to vector<16x256xf32>
    %79 = arith.mulf %76, %78 : vector<16x256xf32>
    %c0_23 = arith.constant 0 : index
    %c0_24 = arith.constant 0 : index
    %80 = vector.load %arg8[%c0_23, %c0_24] : memref<1x256xf32, #tpu.memory_space<vmem>>, vector<1x256xf32>
    %81 = vector.broadcast %80 : vector<1x256xf32> to vector<16x256xf32>
    %82 = arith.addf %79, %81 : vector<16x256xf32>
    %cst_25 = arith.constant 0.000000e+00 : f32
    %83 = vector.broadcast %cst_25 : f32 to vector<16x256xf32>
    %84 = arith.maximumf %82, %83 : vector<16x256xf32>
    %85 = arith.truncf %84 : vector<16x256xf32> to vector<16x256xbf16>
    %c0_26 = arith.constant 0 : index
    %c0_27 = arith.constant 0 : index
    %86 = vector.load %arg9[%c0_26, %c0_27] : memref<256x128xbf16, #tpu.memory_space<vmem>>, vector<256x128xbf16>
    %cst_28 = arith.constant dense<0.000000e+00> : vector<16x128xf32>
    %87 = tpu.matmul %85, %86, %cst_28 {dimension_numbers = #tpu.dot_dimension_numbers<[1], [0], [0], [1], [0, 0, 1, 1], [], []>} : vector<16x256xbf16>, vector<256x128xbf16>, vector<16x128xf32> -> vector<16x128xf32>
    %c0_29 = arith.constant 0 : index
    %c0_30 = arith.constant 0 : index
    %88 = vector.load %arg10[%c0_29, %c0_30] : memref<1x128xf32, #tpu.memory_space<vmem>>, vector<1x128xf32>
    %89 = vector.broadcast %88 : vector<1x128xf32> to vector<16x128xf32>
    %90 = arith.mulf %87, %89 : vector<16x128xf32>
    %c0_31 = arith.constant 0 : index
    %c0_32 = arith.constant 0 : index
    %91 = vector.load %arg11[%c0_31, %c0_32] : memref<1x128xf32, #tpu.memory_space<vmem>>, vector<1x128xf32>
    %92 = vector.broadcast %91 : vector<1x128xf32> to vector<16x128xf32>
    %93 = arith.addf %90, %92 : vector<16x128xf32>
    %c0_33 = arith.constant 0 : index
    %c0_34 = arith.constant 0 : index
    %c0_35 = arith.constant 0 : index
    %94 = vector.load %arg12[%c0_33, %c0_34, %c0_35] : memref<1x16x128xf32, #tpu.memory_space<vmem>>, vector<1x16x128xf32>
    %95 = vector.shape_cast %94 : vector<1x16x128xf32> to vector<16x128xf32>
    %96 = arith.addf %93, %95 : vector<16x128xf32>
    %c0_36 = arith.constant 0 : index
    %c0_37 = arith.constant 0 : index
    %c0_38 = arith.constant 0 : index
    %97 = vector.load %arg13[%c0_36, %c0_37, %c0_38] : memref<1x16x128xf32, #tpu.memory_space<vmem>>, vector<1x16x128xf32>
    %98 = vector.shape_cast %97 : vector<1x16x128xf32> to vector<16x128xf32>
    %99 = vector.shape_cast %96 : vector<16x128xf32> to vector<1x16x128xf32>
    tpu.vector_store %arg13[%c0_36, %c0_37, %c0_38], %99 {strides = array<i32>} : memref<1x16x128xf32, #tpu.memory_space<vmem>>, vector<1x16x128xf32>,
    return
  }
  func.func @transform_0(%arg0: i32, %arg1: i32) -> (i32, i32, i32) {
    %c0_i32 = arith.constant 0 : i32
    %c0_i32_0 = arith.constant 0 : i32
    %c0_i32_1 = arith.constant 0 : i32
    return %arg0, %c0_i32, %c0_i32_0 : i32, i32, i32
  }
  func.func @transform_1(%arg0: i32, %arg1: i32) -> (i32, i32) {
    %c0_i32 = arith.constant 0 : i32
    %c0_i32_0 = arith.constant 0 : i32
    %c0_i32_1 = arith.constant 0 : i32
    return %c0_i32, %c0_i32_0 : i32, i32
  }
  func.func @transform_2(%arg0: i32, %arg1: i32) -> (i32, i32) {
    %c0_i32 = arith.constant 0 : i32
    %c0_i32_0 = arith.constant 0 : i32
    %c0_i32_1 = arith.constant 0 : i32
    return %c0_i32, %c0_i32_0 : i32, i32
  }
  func.func @transform_3(%arg0: i32, %arg1: i32) -> (i32, i32) {
    %c0_i32 = arith.constant 0 : i32
    %c0_i32_0 = arith.constant 0 : i32
    %c0_i32_1 = arith.constant 0 : i32
    return %c0_i32, %c0_i32_0 : i32, i32
  }
  func.func @transform_4(%arg0: i32, %arg1: i32) -> (i32, i32) {
    %c0_i32 = arith.constant 0 : i32
    %c0_i32_0 = arith.constant 0 : i32
    %c0_i32_1 = arith.constant 0 : i32
    return %c0_i32, %c0_i32_0 : i32, i32
  }
  func.func @transform_5(%arg0: i32, %arg1: i32) -> (i32, i32) {
    %c0_i32 = arith.constant 0 : i32
    %c0_i32_0 = arith.constant 0 : i32
    %c0_i32_1 = arith.constant 0 : i32
    return %c0_i32, %c0_i32_0 : i32, i32
  }
  func.func @transform_6(%arg0: i32, %arg1: i32) -> (i32, i32) {
    %c0_i32 = arith.constant 0 : i32
    %c0_i32_0 = arith.constant 0 : i32
    %c0_i32_1 = arith.constant 0 : i32
    return %c0_i32, %c0_i32_0 : i32, i32
  }
  func.func @transform_7(%arg0: i32, %arg1: i32) -> (i32, i32) {
    %c0_i32 = arith.constant 0 : i32
    %c0_i32_0 = arith.constant 0 : i32
    %c0_i32_1 = arith.constant 0 : i32
    return %c0_i32, %c0_i32_0 : i32, i32
  }
  func.func @transform_8(%arg0: i32, %arg1: i32) -> (i32, i32) {
    %c0_i32 = arith.constant 0 : i32
    %c0_i32_0 = arith.constant 0 : i32
    %c0_i32_1 = arith.constant 0 : i32
    return %c0_i32, %c0_i32_0 : i32, i32
  }
  func.func @transform_9(%arg0: i32, %arg1: i32) -> (i32, i32) {
    %c0_i32 = arith.constant 0 : i32
    %c0_i32_0 = arith.constant 0 : i32
    %c0_i32_1 = arith.constant 0 : i32
    return %c0_i32, %c0_i32_0 : i32, i32
  }
  func.func @transform_10(%arg0: i32, %arg1: i32) -> (i32, i32, i32) {
    %c0_i32 = arith.constant 0 : i32
    %c0_i32_0 = arith.constant 0 : i32
    return %arg0, %arg1, %c0_i32 : i32, i32, i32
  }
  func.func @transform_11(%arg0: i32, %arg1: i32) -> (i32, i32, i32) {
    %c0_i32 = arith.constant 0 : i32
    %c0_i32_0 = arith.constant 0 : i32
    return %arg0, %arg1, %c0_i32 : i32, i32, i32
  }
}

</mosaic_0001>

<llo_original>
// kernel: block_forward.1
$region0: #{block_forward.1}
  #allocation0 [shape = 'u32[]', space=smem, size = 0x4, offset = 0x4, fixed_abs, tag = 'smem constant byte address 0x4 - core index']
  #allocation1 [shape = 'u32[144,128]{1,0:T(1,128)}', space=vmem, size = 0x12000, scoped, tag = 'internal scratch']
  %s0 = inlined_call_operand.vmem [shape: f32[2,18,192], index: 0, kind: input, shape index: {}]
  %s1 = inlined_call_operand.vmem [shape: bf16[192,384], index: 1, kind: input, shape index: {}]
  %s2 = inlined_call_operand.vmem [shape: f32[1,384], index: 2, kind: input, shape index: {}]
  %s3 = inlined_call_operand.vmem [shape: f32[1,384], index: 3, kind: input, shape index: {}]
  %s4 = inlined_call_operand.vmem [shape: f32[9,256], index: 4, kind: input, shape index: {}]
  %s5 = inlined_call_operand.vmem [shape: f32[1,256], index: 5, kind: input, shape index: {}]
  %s6 = inlined_call_operand.vmem [shape: f32[1,256], index: 6, kind: input, shape index: {}]
  %s7 = inlined_call_operand.vmem [shape: bf16[256,128], index: 7, kind: input, shape index: {}]
  %s8 = inlined_call_operand.vmem [shape: f32[1,128], index: 8, kind: input, shape index: {}]
  %s9 = inlined_call_operand.vmem [shape: f32[1,128], index: 9, kind: input, shape index: {}]
  %s10 = inlined_call_operand.vmem [shape: f32[2,16,128], index: 10, kind: input, shape index: {}]
  %s11 = inlined_call_operand.vmem [shape: f32[2,16,128], index: 11, kind: output, shape index: {}]
  %s12 = sld [smem:[#allocation0]]
  $region77: #{block_forward.1} parent=0
    _
  %s14 = ssub.s32 1, %s12
  %s15 = scalar_select 0, %s14, %s12
  loop: start=0, step=1, limit=4
  $region2: #{block_forward.1} parent=0 // loop_pre_header
    _
  $region3: #{block_forward.1} parent=0 // loop_header
    %s17 = sphi 0, %s21
    %p18 = scmp.ge.s32.totalorder %s17, 4
    %s24 = sphi 0, %s36
    %s25 = sphi 0, %s32
    %s26 = sphi 0, %s24
    %s27 = sphi 0, %s25
    %s28 = sphi 0, %s26
    %s29 = sphi 0, %s27
    %s39 = sphi 0, %s41
    %s42 = sphi 0, %s39
    %s43 = sphi 0, %s42
    %s59 = sphi 0, %s43
    %s63 = sphi 0, %s63
    %s65 = sphi 0, %s63
    %s66 = sphi 0, %s65
    %s80 = sphi 0, %s66
    %s84 = sphi 0, %s84
    %s86 = sphi 0, %s84
    %s87 = sphi 0, %s86
    %s101 = sphi 0, %s87
    %s105 = sphi 0, %s105
    %s107 = sphi 0, %s105
    %s108 = sphi 0, %s107
    %s122 = sphi 0, %s108
    %s126 = sphi 0, %s126
    %s128 = sphi 0, %s126
    %s129 = sphi 0, %s128
    %s143 = sphi 0, %s129
    %s147 = sphi 0, %s147
    %s149 = sphi 0, %s147
    %s150 = sphi 0, %s149
    %s164 = sphi 0, %s150
    %s168 = sphi 0, %s168
    %s170 = sphi 0, %s168
    %s171 = sphi 0, %s170
    %s185 = sphi 0, %s171
    %s189 = sphi 0, %s189
    %s191 = sphi 0, %s189
    %s192 = sphi 0, %s191
    %s206 = sphi 0, %s192
    %s210 = sphi 0, %s210
    %s212 = sphi 0, %s210
    %s213 = sphi 0, %s212
    %s227 = sphi 0, %s213
    %s231 = sphi 0, %s231
    %s233 = sphi 0, %s231
    %s234 = sphi 0, %s233
    %s248 = sphi 0, %s234
    %s256 = sphi 0, %s258
    %s259 = sphi 0, %s256
    %s260 = sphi 0, %s259
    %s276 = sphi 0, %s260
    %s284 = sphi 0, %s286
    %s287 = sphi 0, %s284
    %s288 = sphi 0, %s287
    %s304 = sphi 0, %s288
  $region4: #{block_forward.1} parent=0 // loop_header_branch
    %20 = sbr.rel (%p18) target = $region8
  $region5: #{block_forward.1} parent=0 // loop_body
    %s22 = ssub.s32 %s17, 1
    %s23 = ssub.s32 %s17, 2
    %s30 = sadd.s32 1, %s25
    %p31 = scmp.ge.s32.totalorder %s30, 1
    %s32 = scalar_select %p31, 0, %s30
    %s33 = sadd.s32 1, %s24
    %s34 = scalar_select %p31, %s33, %s24
    %p35 = scmp.ge.s32.totalorder %s34, 2
    %s36 = scalar_select %p35, 0, %s34
    %s37 = ssub.s32 %s24, %s36
    %p38 = scmp.eq.s32.totalorder %s37, 0
    %s40 = sadd.s32 %s39, 1
    %s41 = scalar_select %p38, %s39, %s40
    %p44 = pneg %p38
    %p45 = scmp.eq.s32.totalorder %s17, 1
    %p46 = por %p44, %p45
    %p47 = scmp.ne.s32.totalorder %s39, %s42
    %p48 = scmp.eq.s32.totalorder %s17, 0
    %p49 = por %p47, %p48
    %p50 = scmp.ne.s32.totalorder %s39, %s42
    %p51 = scmp.eq.s32.totalorder %s22, 1
    %p52 = por %p50, %p51
    %p53 = scmp.ne.s32.totalorder %s42, %s43
    %p54 = scmp.eq.s32.totalorder %s22, 0
    %p55 = por %p53, %p54
    %p56 = scmp.ne.s32.totalorder %s42, %s43
    %p57 = scmp.eq.s32.totalorder %s23, 1
    %p58 = por %p56, %p57
    %p60 = scmp.ne.s32.totalorder %s43, %s59
    %p61 = scmp.eq.s32.totalorder %s23, 0
    %p62 = por %p60, %p61
    %s64 = sadd.s32 %s63, 1
    %p67 = scmp.eq.s32.totalorder %s17, 1
    %p68 = scmp.ne.s32.totalorder %s63, %s65
    %p69 = scmp.eq.s32.totalorder %s17, 0
    %p70 = por %p68, %p69
    %p71 = scmp.ne.s32.totalorder %s63, %s65
    %p72 = scmp.eq.s32.totalorder %s22, 1
    %p73 = por %p71, %p72
    %p74 = scmp.ne.s32.totalorder %s65, %s66
    %p75 = scmp.eq.s32.totalorder %s22, 0
    %p76 = por %p74, %p75
    %p77 = scmp.ne.s32.totalorder %s65, %s66
    %p78 = scmp.eq.s32.totalorder %s23, 1
    %p79 = por %p77, %p78
    %p81 = scmp.ne.s32.totalorder %s66, %s80
    %p82 = scmp.eq.s32.totalorder %s23, 0
    %p83 = por %p81, %p82
    %s85 = sadd.s32 %s84, 1
    %p88 = scmp.eq.s32.totalorder %s17, 1
    %p89 = scmp.ne.s32.totalorder %s84, %s86
    %p90 = scmp.eq.s32.totalorder %s17, 0
    %p91 = por %p89, %p90
    %p92 = scmp.ne.s32.totalorder %s84, %s86
    %p93 = scmp.eq.s32.totalorder %s22, 1
    %p94 = por %p92, %p93
    %p95 = scmp.ne.s32.totalorder %s86, %s87
    %p96 = scmp.eq.s32.totalorder %s22, 0
    %p97 = por %p95, %p96
    %p98 = scmp.ne.s32.totalorder %s86, %s87
    %p99 = scmp.eq.s32.totalorder %s23, 1
    %p100 = por %p98, %p99
    %p102 = scmp.ne.s32.totalorder %s87, %s101
    %p103 = scmp.eq.s32.totalorder %s23, 0
    %p104 = por %p102, %p103
    %s106 = sadd.s32 %s105, 1
    %p109 = scmp.eq.s32.totalorder %s17, 1
    %p110 = scmp.ne.s32.totalorder %s105, %s107
    %p111 = scmp.eq.s32.totalorder %s17, 0
    %p112 = por %p110, %p111
    %p113 = scmp.ne.s32.totalorder %s105, %s107
    %p114 = scmp.eq.s32.totalorder %s22, 1
    %p115 = por %p113, %p114
    %p116 = scmp.ne.s32.totalorder %s107, %s108
    %p117 = scmp.eq.s32.totalorder %s22, 0
    %p118 = por %p116, %p117
    %p119 = scmp.ne.s32.totalorder %s107, %s108
    %p120 = scmp.eq.s32.totalorder %s23, 1
    %p121 = por %p119, %p120
    %p123 = scmp.ne.s32.totalorder %s108, %s122
    %p124 = scmp.eq.s32.totalorder %s23, 0
    %p125 = por %p123, %p124
    %s127 = sadd.s32 %s126, 1
    %p130 = scmp.eq.s32.totalorder %s17, 1
    %p131 = scmp.ne.s32.totalorder %s126, %s128
    %p132 = scmp.eq.s32.totalorder %s17, 0
    %p133 = por %p131, %p132
    %p134 = scmp.ne.s32.totalorder %s126, %s128
    %p135 = scmp.eq.s32.totalorder %s22, 1
    %p136 = por %p134, %p135
    %p137 = scmp.ne.s32.totalorder %s128, %s129
    %p138 = scmp.eq.s32.totalorder %s22, 0
    %p139 = por %p137, %p138
    %p140 = scmp.ne.s32.totalorder %s128, %s129
    %p141 = scmp.eq.s32.totalorder %s23, 1
    %p142 = por %p140, %p141
    %p144 = scmp.ne.s32.totalorder %s129, %s143
    %p145 = scmp.eq.s32.totalorder %s23, 0
    %p146 = por %p144, %p145
    %s148 = sadd.s32 %s147, 1
    %p151 = scmp.eq.s32.totalorder %s17, 1
    %p152 = scmp.ne.s32.totalorder %s147, %s149
    %p153 = scmp.eq.s32.totalorder %s17, 0
    %p154 = por %p152, %p153
    %p155 = scmp.ne.s32.totalorder %s147, %s149
    %p156 = scmp.eq.s32.totalorder %s22, 1
    %p157 = por %p155, %p156
    %p158 = scmp.ne.s32.totalorder %s149, %s150
    %p159 = scmp.eq.s32.totalorder %s22, 0
    %p160 = por %p158, %p159
    %p161 = scmp.ne.s32.totalorder %s149, %s150
    %p162 = scmp.eq.s32.totalorder %s23, 1
    %p163 = por %p161, %p162
    %p165 = scmp.ne.s32.totalorder %s150, %s164
    %p166 = scmp.eq.s32.totalorder %s23, 0
    %p167 = por %p165, %p166
    %s169 = sadd.s32 %s168, 1
    %p172 = scmp.eq.s32.totalorder %s17, 1
    %p173 = scmp.ne.s32.totalorder %s168, %s170
    %p174 = scmp.eq.s32.totalorder %s17, 0
    %p175 = por %p173, %p174
    %p176 = scmp.ne.s32.totalorder %s168, %s170
    %p177 = scmp.eq.s32.totalorder %s22, 1
    %p178 = por %p176, %p177
    %p179 = scmp.ne.s32.totalorder %s170, %s171
    %p180 = scmp.eq.s32.totalorder %s22, 0
    %p181 = por %p179, %p180
    %p182 = scmp.ne.s32.totalorder %s170, %s171
    %p183 = scmp.eq.s32.totalorder %s23, 1
    %p184 = por %p182, %p183
    %p186 = scmp.ne.s32.totalorder %s171, %s185
    %p187 = scmp.eq.s32.totalorder %s23, 0
    %p188 = por %p186, %p187
    %s190 = sadd.s32 %s189, 1
    %p193 = scmp.eq.s32.totalorder %s17, 1
    %p194 = scmp.ne.s32.totalorder %s189, %s191
    %p195 = scmp.eq.s32.totalorder %s17, 0
    %p196 = por %p194, %p195
    %p197 = scmp.ne.s32.totalorder %s189, %s191
    %p198 = scmp.eq.s32.totalorder %s22, 1
    %p199 = por %p197, %p198
    %p200 = scmp.ne.s32.totalorder %s191, %s192
    %p201 = scmp.eq.s32.totalorder %s22, 0
    %p202 = por %p200, %p201
    %p203 = scmp.ne.s32.totalorder %s191, %s192
    %p204 = scmp.eq.s32.totalorder %s23, 1
    %p205 = por %p203, %p204
    %p207 = scmp.ne.s32.totalorder %s192, %s206
    %p208 = scmp.eq.s32.totalorder %s23, 0
    %p209 = por %p207, %p208
    %s211 = sadd.s32 %s210, 1
    %p214 = scmp.eq.s32.totalorder %s17, 1
    %p215 = scmp.ne.s32.totalorder %s210, %s212
    %p216 = scmp.eq.s32.totalorder %s17, 0
    %p217 = por %p215, %p216
    %p218 = scmp.ne.s32.totalorder %s210, %s212
    %p219 = scmp.eq.s32.totalorder %s22, 1
    %p220 = por %p218, %p219
    %p221 = scmp.ne.s32.totalorder %s212, %s213
    %p222 = scmp.eq.s32.totalorder %s22, 0
    %p223 = por %p221, %p222
    %p224 = scmp.ne.s32.totalorder %s212, %s213
    %p225 = scmp.eq.s32.totalorder %s23, 1
    %p226 = por %p224, %p225
    %p228 = scmp.ne.s32.totalorder %s213, %s227
    %p229 = scmp.eq.s32.totalorder %s23, 0
    %p230 = por %p228, %p229
    %s232 = sadd.s32 %s231, 1
    %p235 = scmp.eq.s32.totalorder %s17, 1
    %p236 = scmp.ne.s32.totalorder %s231, %s233
    %p237 = scmp.eq.s32.totalorder %s17, 0
    %p238 = por %p236, %p237
    %p239 = scmp.ne.s32.totalorder %s231, %s233
    %p240 = scmp.eq.s32.totalorder %s22, 1
    %p241 = por %p239, %p240
    %p242 = scmp.ne.s32.totalorder %s233, %s234
    %p243 = scmp.eq.s32.totalorder %s22, 0
    %p244 = por %p242, %p243
    %p245 = scmp.ne.s32.totalorder %s233, %s234
    %p246 = scmp.eq.s32.totalorder %s23, 1
    %p247 = por %p245, %p246
    %p249 = scmp.ne.s32.totalorder %s234, %s248
    %p250 = scmp.eq.s32.totalorder %s23, 0
    %p251 = por %p249, %p250
    %s252 = ssub.s32 %s24, %s36
    %s253 = ssub.s32 %s25, %s32
    %s254 = sor.u32 %s252, %s253
    %p255 = scmp.eq.s32.totalorder %s254, 0
    %s257 = sadd.s32 %s256, 1
    %s258 = scalar_select %p255, %s256, %s257
    %p261 = pneg %p255
    %p262 = scmp.eq.s32.totalorder %s17, 1
    %p263 = por %p261, %p262
    %p264 = scmp.ne.s32.totalorder %s256, %s259
    %p265 = scmp.eq.s32.totalorder %s17, 0
    %p266 = por %p264, %p265
    %p267 = scmp.ne.s32.totalorder %s256, %s259
    %p268 = scmp.eq.s32.totalorder %s22, 1
    %p269 = por %p267, %p268
    %p270 = scmp.ne.s32.totalorder %s259, %s260
    %p271 = scmp.eq.s32.totalorder %s22, 0
    %p272 = por %p270, %p271
    %p273 = scmp.ne.s32.totalorder %s259, %s260
    %p274 = scmp.eq.s32.totalorder %s23, 1
    %p275 = por %p273, %p274
    %p277 = scmp.ne.s32.totalorder %s260, %s276
    %p278 = scmp.eq.s32.totalorder %s23, 0
    %p279 = por %p277, %p278
    %s280 = ssub.s32 %s24, %s36
    %s281 = ssub.s32 %s25, %s32
    %s282 = sor.u32 %s280, %s281
    %p283 = scmp.eq.s32.totalorder %s282, 0
    %s285 = sadd.s32 %s284, 1
    %s286 = scalar_select %p283, %s284, %s285
    %p289 = pneg %p283
    %p290 = scmp.eq.s32.totalorder %s17, 1
    %p291 = por %p289, %p290
    %p292 = scmp.ne.s32.totalorder %s284, %s287
    %p293 = scmp.eq.s32.totalorder %s17, 0
    %p294 = por %p292, %p293
    %p295 = scmp.ne.s32.totalorder %s284, %s287
    %p296 = scmp.eq.s32.totalorder %s22, 1
    %p297 = por %p295, %p296
    %p298 = scmp.ne.s32.totalorder %s287, %s288
    %p299 = scmp.eq.s32.totalorder %s22, 0
    %p300 = por %p298, %p299
    %p301 = scmp.ne.s32.totalorder %s287, %s288
    %p302 = scmp.eq.s32.totalorder %s23, 1
    %p303 = por %p301, %p302
    %p305 = scmp.ne.s32.totalorder %s288, %s304
    %p306 = scmp.eq.s32.totalorder %s23, 0
    %p307 = por %p305, %p306
    %p308 = scmp.le.s32.totalorder 1, %s17
    %p309 = scmp.lt.s32.totalorder %s17, 3
    %p310 = pnand %p308, %p309
    %p311 = pneg %p310
    // Predicated region
    $region9: #{block_forward.1} parent=5 // pred_check
      _
    $region10: #{block_forward.1} parent=5 // pred_check_branch
      %313 = sbr.rel (%p310) target = $region12
    $region11: #{block_forward.1} parent=5 // pred_region
      %s314 = ssub.s32 %s17, 1
      // Predicated region
      $region13: #{block_forward.1} parent=11 // pred_check
        %p315 = pneg %p76
      $region14: #{block_forward.1} parent=11 // pred_check_branch
        %317 = sbr.rel (%p315) target = $region16
      $region15: #{block_forward.1} parent=11 // pred_region
        _
      $region16: #{block_forward.1} parent=11 // pred_fallthru
        _
      // Predicated region
      $region17: #{block_forward.1} parent=11 // pred_check
        %p318 = pneg %p97
      $region18: #{block_forward.1} parent=11 // pred_check_branch
        %320 = sbr.rel (%p318) target = $region20
      $region19: #{block_forward.1} parent=11 // pred_region
        _
      $region20: #{block_forward.1} parent=11 // pred_fallthru
        _
      // Predicated region
      $region21: #{block_forward.1} parent=11 // pred_check
        %p321 = pneg %p118
      $region22: #{block_forward.1} parent=11 // pred_check_branch
        %323 = sbr.rel (%p321) target = $region24
      $region23: #{block_forward.1} parent=11 // pred_region
        _
      $region24: #{block_forward.1} parent=11 // pred_fallthru
        _
      // Predicated region
      $region25: #{block_forward.1} parent=11 // pred_check
        %p324 = pneg %p139
      $region26: #{block_forward.1} parent=11 // pred_check_branch
        %326 = sbr.rel (%p324) target = $region28
      $region27: #{block_forward.1} parent=11 // pred_region
        _
      $region28: #{block_forward.1} parent=11 // pred_fallthru
        _
      // Predicated region
      $region29: #{block_forward.1} parent=11 // pred_check
        %p327 = pneg %p160
      $region30: #{block_forward.1} parent=11 // pred_check_branch
        %329 = sbr.rel (%p327) target = $region32
      $region31: #{block_forward.1} parent=11 // pred_region
        _
      $region32: #{block_forward.1} parent=11 // pred_fallthru
        _
      // Predicated region
      $region33: #{block_forward.1} parent=11 // pred_check
        %p330 = pneg %p181
      $region34: #{block_forward.1} parent=11 // pred_check_branch
        %332 = sbr.rel (%p330) target = $region36
      $region35: #{block_forward.1} parent=11 // pred_region
        _
      $region36: #{block_forward.1} parent=11 // pred_fallthru
        _
      // Predicated region
      $region37: #{block_forward.1} parent=11 // pred_check
        %p333 = pneg %p202
      $region38: #{block_forward.1} parent=11 // pred_check_branch
        %335 = sbr.rel (%p333) target = $region40
      $region39: #{block_forward.1} parent=11 // pred_region
        _
      $region40: #{block_forward.1} parent=11 // pred_fallthru
        _
      // Predicated region
      $region41: #{block_forward.1} parent=11 // pred_check
        %p336 = pneg %p223
      $region42: #{block_forward.1} parent=11 // pred_check_branch
        %338 = sbr.rel (%p336) target = $region44
      $region43: #{block_forward.1} parent=11 // pred_region
        _
      $region44: #{block_forward.1} parent=11 // pred_fallthru
        _
      // Predicated region
      $region45: #{block_forward.1} parent=11 // pred_check
        %p339 = pneg %p244
      $region46: #{block_forward.1} parent=11 // pred_check_branch
        %341 = sbr.rel (%p339) target = $region48
      $region47: #{block_forward.1} parent=11 // pred_region
        _
      $region48: #{block_forward.1} parent=11 // pred_fallthru
        _
    $region12: #{block_forward.1} parent=5 // pred_fallthru
      _
    %p342 = scmp.lt.s32.totalorder %s17, 2
    // Predicated region
    $region49: #{block_forward.1} parent=5 // pred_check
      %p343 = pneg %p342
    $region50: #{block_forward.1} parent=5 // pred_check_branch
      %345 = sbr.rel (%p343) target = $region52
    $region51: #{block_forward.1} parent=5 // pred_region
      // Predicated region
      $region53: #{block_forward.1} parent=51 // pred_check
        %p346 = pneg %p49
      $region54: #{block_forward.1} parent=51 // pred_check_branch
        %348 = sbr.rel (%p346) target = $region56
      $region55: #{block_forward.1} parent=51 // pred_region
        %p349 = scmp.lt.s32.totalorder %s24, 1
        %s350 = scalar_select %p349, %s24, 1
        %s351 = smul.addr %s350, 6
        %s352 = smul.addr %s351, 8
        %s353 = scalar_lea.vmem %s0, %s352
      $region56: #{block_forward.1} parent=51 // pred_fallthru
        _
      // Predicated region
      $region57: #{block_forward.1} parent=51 // pred_check
        %p354 = pneg %p266
      $region58: #{block_forward.1} parent=51 // pred_check_branch
        %356 = sbr.rel (%p354) target = $region60
      $region59: #{block_forward.1} parent=51 // pred_region
        %s357 = smul.u32 2, %s25
        %p358 = scmp.lt.s32.totalorder %s24, 1
        %s359 = scalar_select %p358, %s24, 1
        %p360 = scmp.lt.s32.totalorder %s357, 1
        %s361 = scalar_select %p360, %s357, 1
        %s362 = smul.addr %s359, 2
        %s363 = sadd.s32 %s361, %s362
        %s364 = smul.addr %s363, 8
        %s365 = scalar_lea.vmem %s10, %s364
        %s366 = smul.u32 2, %s25
      $region60: #{block_forward.1} parent=51 // pred_fallthru
        _
    $region52: #{block_forward.1} parent=5 // pred_fallthru
      _
    %p367 = scmp.le.s32.totalorder 1, %s17
    %p368 = scmp.lt.s32.totalorder %s17, 3
    %p369 = pnand %p367, %p368
    %p370 = pneg %p369
    // Predicated region
    $region61: #{block_forward.1} parent=5 // pred_check
      _
    $region62: #{block_forward.1} parent=5 // pred_check_branch
      %372 = sbr.rel (%p369) target = $region64
    $region63: #{block_forward.1} parent=5 // pred_region
      %s373 = ssub.s32 %s17, 1
      %p374 = scmp.lt.s32.totalorder %s26, 1
      %s375 = scalar_select %p374, %s26, 1
      %s376 = smul.addr %s375, 6
      %s377 = smul.addr %s376, 8
      %s378 = scalar_lea.vmem %s0, %s377
      %p379 = pneg %p55
      %p380 = pneg %p52
      %p381 = pneg %p76
      %p382 = pneg %p73
      %p383 = pneg %p97
      %p384 = pneg %p94
      %p385 = pneg %p118
      %p386 = pneg %p115
      %p387 = pneg %p139
      %p388 = pneg %p136
      %p389 = pneg %p160
      %p390 = pneg %p157
      %p391 = pneg %p181
      %p392 = pneg %p178
      %p393 = pneg %p202
      %p394 = pneg %p199
      %p395 = pneg %p223
      %p396 = pneg %p220
      %p397 = pneg %p244
      %p398 = pneg %p241
      %s399 = smul.u32 2, %s27
      %p400 = scmp.lt.s32.totalorder %s26, 1
      %s401 = scalar_select %p400, %s26, 1
      %p402 = scmp.lt.s32.totalorder %s399, 1
      %s403 = scalar_select %p402, %s399, 1
      %s404 = smul.addr %s401, 2
      %s405 = sadd.s32 %s403, %s404
      %s406 = smul.addr %s405, 8
      %s407 = scalar_lea.vmem %s10, %s406
      %p408 = pneg %p272
      %p409 = pneg %p269
      %p410 = pneg %p300
      %p411 = pneg %p297
      %s412 = smul.u32 2, %s27
      %p413 = scmp.lt.s32.totalorder %s26, 1
      %s414 = scalar_select %p413, %s26, 1
      %p415 = scmp.lt.s32.totalorder %s412, 1
      %s416 = scalar_select %p415, %s412, 1
      %s417 = smul.addr %s414, 2
      %s418 = sadd.s32 %s416, %s417
      %s419 = smul.addr %s418, 8
      %s420 = scalar_lea.vmem %s11, %s419
      %p421 = scmp.lt.s32.totalorder %s26, 1
      %s422 = scalar_select %p421, %s26, 1
      %s423 = smul.addr %s422, 6
      %s424 = smul.addr %s423, 8
      %s425 = scalar_lea.vmem %s0, %s424
      %s426 = smul.u32 2, %s27
      %p427 = scmp.lt.s32.totalorder %s26, 1
      %s428 = scalar_select %p427, %s26, 1
      %p429 = scmp.lt.s32.totalorder %s426, 1
      %s430 = scalar_select %p429, %s426, 1
      %s431 = smul.addr %s428, 2
      %s432 = sadd.s32 %s430, %s431
      %s433 = smul.addr %s432, 8
      %s434 = scalar_lea.vmem %s10, %s433
      %s435 = smul.u32 2, %s27
      %s436 = smul.u32 2, %s27
      %p437 = scmp.lt.s32.totalorder %s26, 1
      %s438 = scalar_select %p437, %s26, 1
      %p439 = scmp.lt.s32.totalorder %s436, 1
      %s440 = scalar_select %p439, %s436, 1
      %s441 = smul.addr %s438, 2
      %s442 = sadd.s32 %s440, %s441
      %s443 = smul.addr %s442, 8
      %s444 = scalar_lea.vmem %s11, %s443
      %s445 = smul.u32 2, %s27
      %s447 = smul.u32 %s27, 16
      %s448 = sshra.s32 %s447, 3
      %s449 = sand.u32 %s447, 7
      %s450 = smul.u32 %s448, 2
      %s451 = smul.addr %s450, 8
      %s452 = scalar_lea.vmem %s425, %s451
      %v453 = vld [vmem:[%s452] sm:$0xff]
      %v454 = vld [vmem:[%s452 + $0x8] sm:$0xff]
      %v455 = vld [vmem:[%s452 + $0x10] sm:$0xff]
      %v456 = vld [vmem:[%s452 + $0x18] sm:$0xff]
      %v457 = vld [vmem:[%s452 + $0x20] sm:$0x3]
      %v458 = vld [vmem:[%s452 + $0x28] sm:$0x3]
      %v459 = vpack.c.bf16 %v455, %v453
      %v460 = vpack.c.bf16 %v456, %v454
      %v461 = vpack.c.bf16 %v457, %v457
      %v462 = vpack.c.bf16 %v458, %v458
      %v463 = vld [vmem:[%s1] sm:$0xff]
      %v464 = vld [vmem:[%s1 + $0x8] sm:$0xf]
      %v465 = vld [vmem:[%s1 + $0xc] sm:$0xff]
      %v466 = vld [vmem:[%s1 + $0x14] sm:$0xf]
      %v467 = vld [vmem:[%s1 + $0x18] sm:$0xff]
      %v468 = vld [vmem:[%s1 + $0x20] sm:$0xf]
      %v469 = vld [vmem:[%s1 + $0x24] sm:$0xff]
      %v470 = vld [vmem:[%s1 + $0x2c] sm:$0xf]
      %v471 = vld [vmem:[%s1 + $0x30] sm:$0xff]
      %v472 = vld [vmem:[%s1 + $0x38] sm:$0xf]
      %v473 = vld [vmem:[%s1 + $0x3c] sm:$0xff]
      %v474 = vld [vmem:[%s1 + $0x44] sm:$0xf]
      %v475 = vld [vmem:[%s1 + $0x48] sm:$0xff]
      %v476 = vld [vmem:[%s1 + $0x50] sm:$0xf]
      %v477 = vld [vmem:[%s1 + $0x54] sm:$0xff]
      %v478 = vld [vmem:[%s1 + $0x5c] sm:$0xf]
      %v479 = vld [vmem:[%s1 + $0x60] sm:$0xff]
      %v480 = vld [vmem:[%s1 + $0x68] sm:$0xf]
      %v481 = vld [vmem:[%s1 + $0x6c] sm:$0xff]
      %v482 = vld [vmem:[%s1 + $0x74] sm:$0xf]
      %v483 = vld [vmem:[%s1 + $0x78] sm:$0xff]
      %v484 = vld [vmem:[%s1 + $0x80] sm:$0xf]
      %v485 = vld [vmem:[%s1 + $0x84] sm:$0xff]
      %v486 = vld [vmem:[%s1 + $0x8c] sm:$0xf]
      %v487 = vld [vmem:[%s1 + $0x90] sm:$0xff]
      %v488 = vld [vmem:[%s1 + $0x98] sm:$0xf]
      %v489 = vld [vmem:[%s1 + $0x9c] sm:$0xff]
      %v490 = vld [vmem:[%s1 + $0xa4] sm:$0xf]
      %v491 = vld [vmem:[%s1 + $0xa8] sm:$0xff]
      %v492 = vld [vmem:[%s1 + $0xb0] sm:$0xf]
      %v493 = vld [vmem:[%s1 + $0xb4] sm:$0xff]
      %v494 = vld [vmem:[%s1 + $0xbc] sm:$0xf]
      %v495 = vld [vmem:[%s1 + $0xc0] sm:$0xff]
      %v496 = vld [vmem:[%s1 + $0xc8] sm:$0xf]
      %v497 = vld [vmem:[%s1 + $0xcc] sm:$0xff]
      %v498 = vld [vmem:[%s1 + $0xd4] sm:$0xf]
      %v499 = vld [vmem:[%s1 + $0xd8] sm:$0xff]
      %v500 = vld [vmem:[%s1 + $0xe0] sm:$0xf]
      %v501 = vld [vmem:[%s1 + $0xe4] sm:$0xff]
      %v502 = vld [vmem:[%s1 + $0xec] sm:$0xf]
      %v503 = vld [vmem:[%s1 + $0xf0] sm:$0xff]
      %v504 = vld [vmem:[%s1 + $0xf8] sm:$0xf]
      %v505 = vld [vmem:[%s1 + $0xfc] sm:$0xff]
      %v506 = vld [vmem:[%s1 + $0x104] sm:$0xf]
      %v507 = vld [vmem:[%s1 + $0x108] sm:$0xff]
      %v508 = vld [vmem:[%s1 + $0x110] sm:$0xf]
      %v509 = vld [vmem:[%s1 + $0x114] sm:$0xff]
      %v510 = vld [vmem:[%s1 + $0x11c] sm:$0xf]
      %v559 = vunpack.c.l.b16 %v463
      %v560 = vunpack.c.h.b16 %v463
      %v561 = vunpack.c.l.b16 %v464
      %v562 = vunpack.c.l.b16 %v465
      %v563 = vunpack.c.h.b16 %v465
      %v564 = vunpack.c.l.b16 %v466
      %v565 = vunpack.c.l.b16 %v467
      %v566 = vunpack.c.h.b16 %v467
      %v567 = vunpack.c.l.b16 %v468
      %v568 = vunpack.c.l.b16 %v469
      %v569 = vunpack.c.h.b16 %v469
      %v570 = vunpack.c.l.b16 %v470
      %v571 = vunpack.c.l.b16 %v471
      %v572 = vunpack.c.h.b16 %v471
      %v573 = vunpack.c.l.b16 %v472
      %v574 = vunpack.c.l.b16 %v473
      %v575 = vunpack.c.h.b16 %v473
      %v576 = vunpack.c.l.b16 %v474
      %v577 = vunpack.c.l.b16 %v475
      %v578 = vunpack.c.h.b16 %v475
      %v579 = vunpack.c.l.b16 %v476
      %v580 = vunpack.c.l.b16 %v477
      %v581 = vunpack.c.h.b16 %v477
      %v582 = vunpack.c.l.b16 %v478
      %v583 = vunpack.c.l.b16 %v479
      %v584 = vunpack.c.h.b16 %v479
      %v585 = vunpack.c.l.b16 %v480
      %v586 = vunpack.c.l.b16 %v481
      %v587 = vunpack.c.h.b16 %v481
      %v588 = vunpack.c.l.b16 %v482
      %v589 = vunpack.c.l.b16 %v483
      %v590 = vunpack.c.h.b16 %v483
      %v591 = vunpack.c.l.b16 %v484
      %v592 = vunpack.c.l.b16 %v485
      %v593 = vunpack.c.h.b16 %v485
      %v594 = vunpack.c.l.b16 %v486
      %v595 = vunpack.c.l.b16 %v487
      %v596 = vunpack.c.h.b16 %v487
      %v597 = vunpack.c.l.b16 %v488
      %v598 = vunpack.c.l.b16 %v489
      %v599 = vunpack.c.h.b16 %v489
      %v600 = vunpack.c.l.b16 %v490
      %v601 = vunpack.c.l.b16 %v491
      %v602 = vunpack.c.h.b16 %v491
      %v603 = vunpack.c.l.b16 %v492
      %v604 = vunpack.c.l.b16 %v493
      %v605 = vunpack.c.h.b16 %v493
      %v606 = vunpack.c.l.b16 %v494
      %v607 = vunpack.c.l.b16 %v495
      %v608 = vunpack.c.h.b16 %v495
      %v609 = vunpack.c.l.b16 %v496
      %v610 = vunpack.c.l.b16 %v497
      %v611 = vunpack.c.h.b16 %v497
      %v612 = vunpack.c.l.b16 %v498
      %v613 = vunpack.c.l.b16 %v499
      %v614 = vunpack.c.h.b16 %v499
      %v615 = vunpack.c.l.b16 %v500
      %v616 = vunpack.c.l.b16 %v501
      %v617 = vunpack.c.h.b16 %v501
      %v618 = vunpack.c.l.b16 %v502
      %v619 = vunpack.c.l.b16 %v503
      %v620 = vunpack.c.h.b16 %v503
      %v621 = vunpack.c.l.b16 %v504
      %v622 = vunpack.c.l.b16 %v505
      %v623 = vunpack.c.h.b16 %v505
      %v624 = vunpack.c.l.b16 %v506
      %v625 = vunpack.c.l.b16 %v507
      %v626 = vunpack.c.h.b16 %v507
      %v627 = vunpack.c.l.b16 %v508
      %v628 = vunpack.c.l.b16 %v509
      %v629 = vunpack.c.h.b16 %v509
      %v630 = vunpack.c.l.b16 %v510
      %v631 = vpack.c.b16 %v562, %v559
      %v632 = vpack.c.b16 %v563, %v560
      %v633 = vpack.c.b16 %v564, %v561
      %v634 = vpack.c.b16 %v568, %v565
      %v635 = vpack.c.b16 %v569, %v566
      %v636 = vpack.c.b16 %v570, %v567
      %v637 = vpack.c.b16 %v574, %v571
      %v638 = vpack.c.b16 %v575, %v572
      %v639 = vpack.c.b16 %v576, %v573
      %v640 = vpack.c.b16 %v580, %v577
      %v641 = vpack.c.b16 %v581, %v578
      %v642 = vpack.c.b16 %v582, %v579
      %v643 = vpack.c.b16 %v586, %v583
      %v644 = vpack.c.b16 %v587, %v584
      %v645 = vpack.c.b16 %v588, %v585
      %v646 = vpack.c.b16 %v592, %v589
      %v647 = vpack.c.b16 %v593, %v590
      %v648 = vpack.c.b16 %v594, %v591
      %v649 = vpack.c.b16 %v598, %v595
      %v650 = vpack.c.b16 %v599, %v596
      %v651 = vpack.c.b16 %v600, %v597
      %v652 = vpack.c.b16 %v604, %v601
      %v653 = vpack.c.b16 %v605, %v602
      %v654 = vpack.c.b16 %v606, %v603
      %v655 = vpack.c.b16 %v610, %v607
      %v656 = vpack.c.b16 %v611, %v608
      %v657 = vpack.c.b16 %v612, %v609
      %v658 = vpack.c.b16 %v616, %v613
      %v659 = vpack.c.b16 %v617, %v614
      %v660 = vpack.c.b16 %v618, %v615
      %v661 = vpack.c.b16 %v622, %v619
      %v662 = vpack.c.b16 %v623, %v620
      %v663 = vpack.c.b16 %v624, %v621
      %v664 = vpack.c.b16 %v628, %v625
      %v665 = vpack.c.b16 %v629, %v626
      %v666 = vpack.c.b16 %v630, %v627
      %vm703 = vcmask 523264
      %v705 = vsel %vm703, %v460, 0
      %v708 = vsel %vm703, %v462, 0
      %710 = vmatprep.subr.bf16.mxu0 %v653
      %711 = vmatpush1.bf16.msra.mxu0 %v652
      %712 = vmatprep.subr.bf16.mxu0 %v650
      %713 = vmatpush1.bf16.msra.mxu0 %v649
      %714 = vmatprep.subr.bf16.mxu0 %v647
      %715 = vmatpush1.bf16.msra.mxu0 %v646
      %716 = vmatprep.subr.bf16.mxu0 %v644
      %717 = vmatpush1.bf16.msra.mxu0 %v643
      %718 = vmatprep.subr.bf16.mxu0 %v641
      %719 = vmatpush1.bf16.msra.mxu0 %v640
      %720 = vmatprep.subr.bf16.mxu0 %v638
      %721 = vmatpush1.bf16.msra.mxu0 %v637
      %722 = vmatprep.subr.bf16.mxu0 %v635
      %723 = vmatpush1.bf16.msra.mxu0 %v634
      %724 = vmatprep.subr.bf16.mxu0 %v632
      %725 = vmatpush1.bf16.msra.mxu0 %v631
      %726 = vmatprep.subr.bf16.mxu0 0
      %727 = vmatpush2.bf16.msra.mxu0 0
      %728 = vmatprep.subr.bf16.mxu0 0
      %729 = vmatpush2.bf16.msra.mxu0 0
      %730 = vmatprep.subr.bf16.mxu0 0
      %731 = vmatpush2.bf16.msra.mxu0 0
      %732 = vmatprep.subr.bf16.mxu0 0
      %733 = vmatpush2.bf16.msra.mxu0 0
      %734 = vmatprep.subr.bf16.mxu0 %v665
      %735 = vmatpush2.bf16.msra.mxu0 %v664
      %736 = vmatprep.subr.bf16.mxu0 %v662
      %737 = vmatpush2.bf16.msra.mxu0 %v661
      %738 = vmatprep.subr.bf16.mxu0 %v659
      %739 = vmatpush2.bf16.msra.mxu0 %v658
      %740 = vmatprep.subr.bf16.mxu0 %v656
      %741 = vmatpush2.bf16.msra.mxu0 %v655
      %742 = vmatprep.mubr.bf16.mxu0 %v705
      %743 = vmatmul.mubr.bf16.gmra.mxu0 %v459
      %v744 = vpop.f32.mrf.mxu0
      %v745 = vadd.f32 0.0, %v744
      %v746 = vpop.f32.mrf.mxu0
      %v747 = vadd.f32 0.0, %v746
      %v748 = vpop.f32.mrf.mxu0
      %v749 = vadd.f32 0.0, %v748
      %v750 = vpop.f32.mrf.mxu0
      %v751 = vadd.f32 0.0, %v750
      %752 = vmatprep.mubr.bf16.mxu0 %v708
      %753 = vmatmul.mubr.bf16.gmra.mxu0 %v461
      %v754 = vpop.f32.mrf.mxu0
      %v755 = vadd.f32 0.0, %v754
      %v756 = vpop.f32.mrf.mxu0
      %v757 = vadd.f32 0.0, %v756
      %v758 = vpop.f32.mrf.mxu0
      %v759 = vpop.f32.mrf.mxu0
      %760 = vdwg.mxu0
      %761 = vmatprep.subr.bf16.mxu0 0
      %762 = vmatpush1.bf16.msra.mxu0 %v654
      %763 = vmatprep.subr.bf16.mxu0 0
      %764 = vmatpush1.bf16.msra.mxu0 %v651
      %765 = vmatprep.subr.bf16.mxu0 0
      %766 = vmatpush1.bf16.msra.mxu0 %v648
      %767 = vmatprep.subr.bf16.mxu0 0
      %768 = vmatpush1.bf16.msra.mxu0 %v645
      %769 = vmatprep.subr.bf16.mxu0 0
      %770 = vmatpush1.bf16.msra.mxu0 %v642
      %771 = vmatprep.subr.bf16.mxu0 0
      %772 = vmatpush1.bf16.msra.mxu0 %v639
      %773 = vmatprep.subr.bf16.mxu0 0
      %774 = vmatpush1.bf16.msra.mxu0 %v636
      %775 = vmatprep.subr.bf16.mxu0 0
      %776 = vmatpush1.bf16.msra.mxu0 %v633
      %777 = vmatprep.subr.bf16.mxu0 0
      %778 = vmatpush2.bf16.msra.mxu0 0
      %779 = vmatprep.subr.bf16.mxu0 0
      %780 = vmatpush2.bf16.msra.mxu0 0
      %781 = vmatprep.subr.bf16.mxu0 0
      %782 = vmatpush2.bf16.msra.mxu0 0
      %783 = vmatprep.subr.bf16.mxu0 0
      %784 = vmatpush2.bf16.msra.mxu0 0
      %785 = vmatprep.subr.bf16.mxu0 0
      %786 = vmatpush2.bf16.msra.mxu0 %v666
      %787 = vmatprep.subr.bf16.mxu0 0
      %788 = vmatpush2.bf16.msra.mxu0 %v663
      %789 = vmatprep.subr.bf16.mxu0 0
      %790 = vmatpush2.bf16.msra.mxu0 %v660
      %791 = vmatprep.subr.bf16.mxu0 0
      %792 = vmatpush2.bf16.msra.mxu0 %v657
      %793 = vmatprep.mubr.bf16.mxu0 %v705
      %794 = vmatmul.mubr.bf16.gmra.mxu0 %v459
      %v795 = vpop.f32.mrf.mxu0
      %v796 = vadd.f32 0.0, %v795
      %v797 = vpop.f32.mrf.mxu0
      %v798 = vpop.f32.mrf.mxu0
      %v799 = vadd.f32 0.0, %v798
      %v800 = vpop.f32.mrf.mxu0
      %801 = vmatprep.mubr.bf16.mxu0 %v708
      %802 = vmatmul.mubr.bf16.gmra.mxu0 %v461
      %v803 = vpop.f32.mrf.mxu0
      %v804 = vadd.f32 0.0, %v803
      %v805 = vpop.f32.mrf.mxu0
      %v806 = vpop.f32.mrf.mxu0
      %v807 = vpop.f32.mrf.mxu0
      %808 = vdwg.mxu0
      %v809 = vld [vmem:[%s2] sm:$0x7]
      %v811 = vlaneseq
      %v812 = vshrl.u32 %v811, 7
      %v813 = vsub.s32 0, %v812
      %v814 = vrot.slane %v809, %v813
      %v815 = vlaneseq
      %v816 = vshrl.u32 %v815, 7
      %v817 = vsub.s32 1, %v816
      %v818 = vrot.slane %v809, %v817
      %v819 = vlaneseq
      %v820 = vshrl.u32 %v819, 7
      %v821 = vsub.s32 2, %v820
      %v822 = vrot.slane %v809, %v821
      %v826 = vmul.f32 %v745, %v814
      %v827 = vmul.f32 %v747, %v818
      %v828 = vmul.f32 %v796, %v822
      %v829 = vmul.f32 %v749, %v814
      %v830 = vmul.f32 %v751, %v818
      %v831 = vmul.f32 %v799, %v822
      %v832 = vmul.f32 %v755, %v814
      %v833 = vmul.f32 %v757, %v818
      %v834 = vmul.f32 %v804, %v822
      %v835 = vld [vmem:[%s3] sm:$0x7]
      %v837 = vlaneseq
      %v838 = vshrl.u32 %v837, 7
      %v839 = vsub.s32 0, %v838
      %v840 = vrot.slane %v835, %v839
      %v841 = vlaneseq
      %v842 = vshrl.u32 %v841, 7
      %v843 = vsub.s32 1, %v842
      %v844 = vrot.slane %v835, %v843
      %v845 = vlaneseq
      %v846 = vshrl.u32 %v845, 7
      %v847 = vsub.s32 2, %v846
      %v848 = vrot.slane %v835, %v847
      %v852 = vadd.f32 %v826, %v840
      %v853 = vadd.f32 %v827, %v844
      %v854 = vadd.f32 %v828, %v848
      %v855 = vadd.f32 %v829, %v840
      %v856 = vadd.f32 %v830, %v844
      %v857 = vadd.f32 %v831, %v848
      %v858 = vadd.f32 %v832, %v840
      %v859 = vadd.f32 %v833, %v844
      %v860 = vadd.f32 %v834, %v848
      %v861 = vmax.f32 %v852, 0.0
      %v862 = vmax.f32 %v853, 0.0
      %v863 = vmax.f32 %v854, 0.0
      %v864 = vmax.f32 %v855, 0.0
      %v865 = vmax.f32 %v856, 0.0
      %v866 = vmax.f32 %v857, 0.0
      %v867 = vmax.f32 %v858, 0.0
      %v868 = vmax.f32 %v859, 0.0
      %v869 = vmax.f32 %v860, 0.0
      %v870 = vlaneseq
      %v871 = vshrl.u32 %v870, 7
      %v872 = vadd.s32 %v871, 8
      %v873 = vadd.s32 %v871, 16
      %v874 = vstv %s447
      %v875 = vadd.s32 %v874, %v871
      %v876 = vadd.s32 %v874, %v872
      %v877 = vadd.s32 %v874, %v873
      %vm878 = vcmp.ge.s32.totalorder %v875, 1
      %vm879 = vcmp.ge.s32.totalorder %v876, 1
      %vm880 = vcmp.ge.s32.totalorder %v877, 1
      %vm881 = vcmp.le.s32.totalorder %v875, 16
      %vm882 = vcmp.le.s32.totalorder %v876, 16
      %vm883 = vcmp.le.s32.totalorder %v877, 16
      %vm884 = vmand %vm878, %vm881
      %vm885 = vmand %vm879, %vm882
      %vm886 = vmand %vm880, %vm883
      %v887 = vsel %vm884, 1, 0
      %v888 = vsel %vm885, 1, 0
      %v889 = vsel %vm886, 1, 0
      %vm890 = vcmp.eq.s32.totalorder %v887, 1
      %vm891 = vcmp.eq.s32.totalorder %v888, 1
      %vm892 = vcmp.eq.s32.totalorder %v889, 1
      %v893 = vsel %vm890, %v861, 0.0
      %v894 = vsel %vm890, %v862, 0.0
      %v895 = vsel %vm890, %v863, 0.0
      %v896 = vsel %vm891, %v864, 0.0
      %v897 = vsel %vm891, %v865, 0.0
      %v898 = vsel %vm891, %v866, 0.0
      %v899 = vsel %vm892, %v867, 0.0
      %v900 = vsel %vm892, %v868, 0.0
      %v901 = vsel %vm892, %v869, 0.0
      %v902 = vld [vmem:[%s4] ss:$8 sm:$0x3]
      %v904 = vlaneseq
      %v905 = vshrl.u32 %v904, 7
      %v906 = vsub.s32 0, %v905
      %v907 = vrot.slane %v902, %v906
      %v908 = vlaneseq
      %v909 = vshrl.u32 %v908, 7
      %v910 = vsub.s32 1, %v909
      %v911 = vrot.slane %v902, %v910
      %v914 = vmul.f32 %v893, %v907
      %v915 = vmul.f32 %v894, %v911
      %v916 = vmul.f32 %v896, %v907
      %v917 = vmul.f32 %v897, %v911
      %v918 = vadd.f32 %v914, 0.0
      %v919 = vadd.f32 %v915, 0.0
      %v920 = vadd.f32 %v916, 0.0
      %v921 = vadd.f32 %v917, 0.0
      %s922 = scalar_lea.vmem %s4, 3
      %v923 = vld [vmem:[%s922] ss:$8 sm:$0x3]
      %v925 = vlaneseq
      %v926 = vshrl.u32 %v925, 7
      %v927 = vsub.s32 0, %v926
      %v928 = vrot.slane %v923, %v927
      %v929 = vlaneseq
      %v930 = vshrl.u32 %v929, 7
      %v931 = vsub.s32 1, %v930
      %v932 = vrot.slane %v923, %v931
      %v935 = vmul.f32 %v893, %v928
      %v936 = vmul.f32 %v894, %v932
      %v937 = vmul.f32 %v896, %v928
      %v938 = vmul.f32 %v897, %v932
      %v939 = vmul.f32 %v899, %v928
      %v940 = vmul.f32 %v900, %v932
      %vm947 = vcmask 1046528
      %v948 = vrot.slane %v935, 1
      %v949 = vrot.slane %v937, 1
      %v950 = vsel %vm947, %v948, %v949
      %v951 = vrot.slane %v936, 1
      %v952 = vrot.slane %v938, 1
      %v953 = vsel %vm947, %v951, %v952
      %v954 = vrot.slane %v939, 1
      %v955 = vsel %vm947, %v949, %v954
      %v956 = vrot.slane %v940, 1
      %v957 = vsel %vm947, %v952, %v956
      %v962 = vadd.f32 %v918, %v950
      %v963 = vadd.f32 %v919, %v953
      %v964 = vadd.f32 %v920, %v955
      %v965 = vadd.f32 %v921, %v957
      %s966 = scalar_lea.vmem %s4, 6
      %v967 = vld [vmem:[%s966] ss:$8 sm:$0x3]
      %v969 = vlaneseq
      %v970 = vshrl.u32 %v969, 7
      %v971 = vsub.s32 0, %v970
      %v972 = vrot.slane %v967, %v971
      %v973 = vlaneseq
      %v974 = vshrl.u32 %v973, 7
      %v975 = vsub.s32 1, %v974
      %v976 = vrot.slane %v967, %v975
      %v979 = vmul.f32 %v893, %v972
      %v980 = vmul.f32 %v894, %v976
      %v981 = vmul.f32 %v896, %v972
      %v982 = vmul.f32 %v897, %v976
      %v983 = vmul.f32 %v899, %v972
      %v984 = vmul.f32 %v900, %v976
      %vm991 = vcmask 1045504
      %v992 = vrot.slane %v979, 2
      %v993 = vrot.slane %v981, 2
      %v994 = vsel %vm991, %v992, %v993
      %v995 = vrot.slane %v980, 2
      %v996 = vrot.slane %v982, 2
      %v997 = vsel %vm991, %v995, %v996
      %v998 = vrot.slane %v983, 2
      %v999 = vsel %vm991, %v993, %v998
      %v1000 = vrot.slane %v984, 2
      %v1001 = vsel %vm991, %v996, %v1000
      %v1006 = vadd.f32 %v962, %v994
      %v1007 = vadd.f32 %v963, %v997
      %v1008 = vadd.f32 %v964, %v999
      %v1009 = vadd.f32 %v965, %v1001
      %s1010 = scalar_lea.vmem %s4, 1
      %v1011 = vld [vmem:[%s1010] ss:$8 sm:$0x3]
      %v1013 = vlaneseq
      %v1014 = vshrl.u32 %v1013, 7
      %v1015 = vsub.s32 0, %v1014
      %v1016 = vrot.slane %v1011, %v1015
      %v1017 = vlaneseq
      %v1018 = vshrl.u32 %v1017, 7
      %v1019 = vsub.s32 1, %v1018
      %v1020 = vrot.slane %v1011, %v1019
      %1021 = vrot.lane.b32.xlu0 %v1016, 16
      %v1022 = vpop.permute.xlu0 %1021
      %1023 = vrot.lane.b32.xlu0 %v1020, 16
      %v1024 = vpop.permute.xlu0 %1023
      %vm1025 = vcmask 130048
      %v1026 = vsel %vm1025, %v1022, %v1024
      %v1030 = vmul.f32 %v893, %v1022
      %v1031 = vmul.f32 %v894, %v1026
      %v1032 = vmul.f32 %v895, %v1024
      %v1033 = vmul.f32 %v896, %v1022
      %v1034 = vmul.f32 %v897, %v1026
      %v1035 = vmul.f32 %v898, %v1024
      %1042 = vrot.lane.b32.xlu0 %v1030, 112
      %v1043 = vpop.permute.xlu0 %1042
      %1044 = vrot.lane.b32.xlu0 %v1031, 112
      %v1045 = vpop.permute.xlu0 %1044
      %1046 = vrot.lane.b32.xlu0 %v1032, 112
      %v1047 = vpop.permute.xlu0 %1046
      %1048 = vrot.lane.b32.xlu0 %v1033, 112
      %v1049 = vpop.permute.xlu0 %1048
      %1050 = vrot.lane.b32.xlu0 %v1034, 112
      %v1051 = vpop.permute.xlu0 %1050
      %1052 = vrot.lane.b32.xlu0 %v1035, 112
      %v1053 = vpop.permute.xlu0 %1052
      %vm1054 = vcmask 916480
      %v1055 = vsel %vm1054, %v1043, %v1045
      %v1056 = vsel %vm1054, %v1045, %v1047
      %v1057 = vsel %vm1054, %v1049, %v1051
      %v1058 = vsel %vm1054, %v1051, %v1053
      %v1063 = vadd.f32 %v1006, %v1055
      %v1064 = vadd.f32 %v1007, %v1056
      %v1065 = vadd.f32 %v1008, %v1057
      %v1066 = vadd.f32 %v1009, %v1058
      %s1067 = scalar_lea.vmem %s4, 4
      %v1068 = vld [vmem:[%s1067] ss:$8 sm:$0x3]
      %v1070 = vlaneseq
      %v1071 = vshrl.u32 %v1070, 7
      %v1072 = vsub.s32 0, %v1071
      %v1073 = vrot.slane %v1068, %v1072
      %v1074 = vlaneseq
      %v1075 = vshrl.u32 %v1074, 7
      %v1076 = vsub.s32 1, %v1075
      %v1077 = vrot.slane %v1068, %v1076
      %1078 = vrot.lane.b32.xlu0 %v1073, 16
      %v1079 = vpop.permute.xlu0 %1078
      %1080 = vrot.lane.b32.xlu0 %v1077, 16
      %v1081 = vpop.permute.xlu0 %1080
      %v1082 = vsel %vm1025, %v1079, %v1081
      %v1086 = vmul.f32 %v893, %v1079
      %v1087 = vmul.f32 %v894, %v1082
      %v1088 = vmul.f32 %v895, %v1081
      %v1089 = vmul.f32 %v896, %v1079
      %v1090 = vmul.f32 %v897, %v1082
      %v1091 = vmul.f32 %v898, %v1081
      %v1092 = vmul.f32 %v899, %v1079
      %v1093 = vmul.f32 %v900, %v1082
      %v1094 = vmul.f32 %v901, %v1081
      %v1104 = vrot.slane %v1086, 1
      %v1105 = vrot.slane %v1089, 1
      %v1106 = vsel %vm947, %v1104, %v1105
      %v1107 = vrot.slane %v1087, 1
      %v1108 = vrot.slane %v1090, 1
      %v1109 = vsel %vm947, %v1107, %v1108
      %v1110 = vrot.slane %v1088, 1
      %v1111 = vrot.slane %v1091, 1
      %v1112 = vsel %vm947, %v1110, %v1111
      %v1113 = vrot.slane %v1092, 1
      %v1114 = vsel %vm947, %v1105, %v1113
      %v1115 = vrot.slane %v1093, 1
      %v1116 = vsel %vm947, %v1108, %v1115
      %v1117 = vrot.slane %v1094, 1
      %v1118 = vsel %vm947, %v1111, %v1117
      %1119 = vrot.lane.b32.xlu0 %v1106, 112
      %v1120 = vpop.permute.xlu0 %1119
      %1121 = vrot.lane.b32.xlu0 %v1109, 112
      %v1122 = vpop.permute.xlu0 %1121
      %1123 = vrot.lane.b32.xlu0 %v1112, 112
      %v1124 = vpop.permute.xlu0 %1123
      %1125 = vrot.lane.b32.xlu0 %v1114, 112
      %v1126 = vpop.permute.xlu0 %1125
      %1127 = vrot.lane.b32.xlu0 %v1116, 112
      %v1128 = vpop.permute.xlu0 %1127
      %1129 = vrot.lane.b32.xlu0 %v1118, 112
      %v1130 = vpop.permute.xlu0 %1129
      %v1131 = vsel %vm1054, %v1120, %v1122
      %v1132 = vsel %vm1054, %v1122, %v1124
      %v1133 = vsel %vm1054, %v1126, %v1128
      %v1134 = vsel %vm1054, %v1128, %v1130
      %v1139 = vadd.f32 %v1063, %v1131
      %v1140 = vadd.f32 %v1064, %v1132
      %v1141 = vadd.f32 %v1065, %v1133
      %v1142 = vadd.f32 %v1066, %v1134
      %s1143 = scalar_lea.vmem %s4, 7
      %v1144 = vld [vmem:[%s1143] ss:$8 sm:$0x3]
      %v1146 = vlaneseq
      %v1147 = vshrl.u32 %v1146, 7
      %v1148 = vsub.s32 0, %v1147
      %v1149 = vrot.slane %v1144, %v1148
      %v1150 = vlaneseq
      %v1151 = vshrl.u32 %v1150, 7
      %v1152 = vsub.s32 1, %v1151
      %v1153 = vrot.slane %v1144, %v1152
      %1154 = vrot.lane.b32.xlu0 %v1149, 16
      %v1155 = vpop.permute.xlu0 %1154
      %1156 = vrot.lane.b32.xlu0 %v1153, 16
      %v1157 = vpop.permute.xlu0 %1156
      %v1158 = vsel %vm1025, %v1155, %v1157
      %v1162 = vmul.f32 %v893, %v1155
      %v1163 = vmul.f32 %v894, %v1158
      %v1164 = vmul.f32 %v895, %v1157
      %v1165 = vmul.f32 %v896, %v1155
      %v1166 = vmul.f32 %v897, %v1158
      %v1167 = vmul.f32 %v898, %v1157
      %v1168 = vmul.f32 %v899, %v1155
      %v1169 = vmul.f32 %v900, %v1158
      %v1170 = vmul.f32 %v901, %v1157
      %v1180 = vrot.slane %v1162, 2
      %v1181 = vrot.slane %v1165, 2
      %v1182 = vsel %vm991, %v1180, %v1181
      %v1183 = vrot.slane %v1163, 2
      %v1184 = vrot.slane %v1166, 2
      %v1185 = vsel %vm991, %v1183, %v1184
      %v1186 = vrot.slane %v1164, 2
      %v1187 = vrot.slane %v1167, 2
      %v1188 = vsel %vm991, %v1186, %v1187
      %v1189 = vrot.slane %v1168, 2
      %v1190 = vsel %vm991, %v1181, %v1189
      %v1191 = vrot.slane %v1169, 2
      %v1192 = vsel %vm991, %v1184, %v1191
      %v1193 = vrot.slane %v1170, 2
      %v1194 = vsel %vm991, %v1187, %v1193
      %1195 = vrot.lane.b32.xlu0 %v1182, 112
      %v1196 = vpop.permute.xlu0 %1195
      %1197 = vrot.lane.b32.xlu0 %v1185, 112
      %v1198 = vpop.permute.xlu0 %1197
      %1199 = vrot.lane.b32.xlu0 %v1188, 112
      %v1200 = vpop.permute.xlu0 %1199
      %1201 = vrot.lane.b32.xlu0 %v1190, 112
      %v1202 = vpop.permute.xlu0 %1201
      %1203 = vrot.lane.b32.xlu0 %v1192, 112
      %v1204 = vpop.permute.xlu0 %1203
      %1205 = vrot.lane.b32.xlu0 %v1194, 112
      %v1206 = vpop.permute.xlu0 %1205
      %v1207 = vsel %vm1054, %v1196, %v1198
      %v1208 = vsel %vm1054, %v1198, %v1200
      %v1209 = vsel %vm1054, %v1202, %v1204
      %v1210 = vsel %vm1054, %v1204, %v1206
      %v1215 = vadd.f32 %v1139, %v1207
      %v1216 = vadd.f32 %v1140, %v1208
      %v1217 = vadd.f32 %v1141, %v1209
      %v1218 = vadd.f32 %v1142, %v1210
      %s1219 = scalar_lea.vmem %s4, 2
      %v1220 = vld [vmem:[%s1219] ss:$8 sm:$0x3]
      %v1222 = vlaneseq
      %v1223 = vshrl.u32 %v1222, 7
      %v1224 = vsub.s32 0, %v1223
      %v1225 = vrot.slane %v1220, %v1224
      %v1226 = vlaneseq
      %v1227 = vshrl.u32 %v1226, 7
      %v1228 = vsub.s32 1, %v1227
      %v1229 = vrot.slane %v1220, %v1228
      %1230 = vrot.lane.b32.xlu0 %v1225, 32
      %v1231 = vpop.permute.xlu0 %1230
      %1232 = vrot.lane.b32.xlu0 %v1229, 32
      %v1233 = vpop.permute.xlu0 %1232
      %vm1234 = vcmask 261120
      %v1235 = vsel %vm1234, %v1231, %v1233
      %v1239 = vmul.f32 %v893, %v1231
      %v1240 = vmul.f32 %v894, %v1235
      %v1241 = vmul.f32 %v895, %v1233
      %v1242 = vmul.f32 %v896, %v1231
      %v1243 = vmul.f32 %v897, %v1235
      %v1244 = vmul.f32 %v898, %v1233
      %1251 = vrot.lane.b32.xlu0 %v1239, 96
      %v1252 = vpop.permute.xlu0 %1251
      %1253 = vrot.lane.b32.xlu0 %v1240, 96
      %v1254 = vpop.permute.xlu0 %1253
      %1255 = vrot.lane.b32.xlu0 %v1241, 96
      %v1256 = vpop.permute.xlu0 %1255
      %1257 = vrot.lane.b32.xlu0 %v1242, 96
      %v1258 = vpop.permute.xlu0 %1257
      %1259 = vrot.lane.b32.xlu0 %v1243, 96
      %v1260 = vpop.permute.xlu0 %1259
      %1261 = vrot.lane.b32.xlu0 %v1244, 96
      %v1262 = vpop.permute.xlu0 %1261
      %vm1263 = vcmask 785408
      %v1264 = vsel %vm1263, %v1252, %v1254
      %v1265 = vsel %vm1263, %v1254, %v1256
      %v1266 = vsel %vm1263, %v1258, %v1260
      %v1267 = vsel %vm1263, %v1260, %v1262
      %v1272 = vadd.f32 %v1215, %v1264
      %v1273 = vadd.f32 %v1216, %v1265
      %v1274 = vadd.f32 %v1217, %v1266
      %v1275 = vadd.f32 %v1218, %v1267
      %s1276 = scalar_lea.vmem %s4, 5
      %v1277 = vld [vmem:[%s1276] ss:$8 sm:$0x3]
      %v1279 = vlaneseq
      %v1280 = vshrl.u32 %v1279, 7
      %v1281 = vsub.s32 0, %v1280
      %v1282 = vrot.slane %v1277, %v1281
      %v1283 = vlaneseq
      %v1284 = vshrl.u32 %v1283, 7
      %v1285 = vsub.s32 1, %v1284
      %v1286 = vrot.slane %v1277, %v1285
      %1287 = vrot.lane.b32.xlu0 %v1282, 32
      %v1288 = vpop.permute.xlu0 %1287
      %1289 = vrot.lane.b32.xlu0 %v1286, 32
      %v1290 = vpop.permute.xlu0 %1289
      %v1291 = vsel %vm1234, %v1288, %v1290
      %v1295 = vmul.f32 %v893, %v1288
      %v1296 = vmul.f32 %v894, %v1291
      %v1297 = vmul.f32 %v895, %v1290
      %v1298 = vmul.f32 %v896, %v1288
      %v1299 = vmul.f32 %v897, %v1291
      %v1300 = vmul.f32 %v898, %v1290
      %v1301 = vmul.f32 %v899, %v1288
      %v1302 = vmul.f32 %v900, %v1291
      %v1303 = vmul.f32 %v901, %v1290
      %v1313 = vrot.slane %v1295, 1
      %v1314 = vrot.slane %v1298, 1
      %v1315 = vsel %vm947, %v1313, %v1314
      %v1316 = vrot.slane %v1296, 1
      %v1317 = vrot.slane %v1299, 1
      %v1318 = vsel %vm947, %v1316, %v1317
      %v1319 = vrot.slane %v1297, 1
      %v1320 = vrot.slane %v1300, 1
      %v1321 = vsel %vm947, %v1319, %v1320
      %v1322 = vrot.slane %v1301, 1
      %v1323 = vsel %vm947, %v1314, %v1322
      %v1324 = vrot.slane %v1302, 1
      %v1325 = vsel %vm947, %v1317, %v1324
      %v1326 = vrot.slane %v1303, 1
      %v1327 = vsel %vm947, %v1320, %v1326
      %1328 = vrot.lane.b32.xlu0 %v1315, 96
      %v1329 = vpop.permute.xlu0 %1328
      %1330 = vrot.lane.b32.xlu0 %v1318, 96
      %v1331 = vpop.permute.xlu0 %1330
      %1332 = vrot.lane.b32.xlu0 %v1321, 96
      %v1333 = vpop.permute.xlu0 %1332
      %1334 = vrot.lane.b32.xlu0 %v1323, 96
      %v1335 = vpop.permute.xlu0 %1334
      %1336 = vrot.lane.b32.xlu0 %v1325, 96
      %v1337 = vpop.permute.xlu0 %1336
      %1338 = vrot.lane.b32.xlu0 %v1327, 96
      %v1339 = vpop.permute.xlu0 %1338
      %v1340 = vsel %vm1263, %v1329, %v1331
      %v1341 = vsel %vm1263, %v1331, %v1333
      %v1342 = vsel %vm1263, %v1335, %v1337
      %v1343 = vsel %vm1263, %v1337, %v1339
      %v1348 = vadd.f32 %v1272, %v1340
      %v1349 = vadd.f32 %v1273, %v1341
      %v1350 = vadd.f32 %v1274, %v1342
      %v1351 = vadd.f32 %v1275, %v1343
      %s1352 = scalar_lea.vmem %s4, 16
      %v1353 = vld [vmem:[%s1352] ss:$8 sm:$0x3]
      %v1355 = vlaneseq
      %v1356 = vshrl.u32 %v1355, 7
      %v1357 = vsub.s32 0, %v1356
      %v1358 = vrot.slane %v1353, %v1357
      %v1359 = vlaneseq
      %v1360 = vshrl.u32 %v1359, 7
      %v1361 = vsub.s32 1, %v1360
      %v1362 = vrot.slane %v1353, %v1361
      %1363 = vrot.lane.b32.xlu0 %v1358, 32
      %v1364 = vpop.permute.xlu0 %1363
      %1365 = vrot.lane.b32.xlu0 %v1362, 32
      %v1366 = vpop.permute.xlu0 %1365
      %v1367 = vsel %vm1234, %v1364, %v1366
      %v1371 = vmul.f32 %v893, %v1364
      %v1372 = vmul.f32 %v894, %v1367
      %v1373 = vmul.f32 %v895, %v1366
      %v1374 = vmul.f32 %v896, %v1364
      %v1375 = vmul.f32 %v897, %v1367
      %v1376 = vmul.f32 %v898, %v1366
      %v1377 = vmul.f32 %v899, %v1364
      %v1378 = vmul.f32 %v900, %v1367
      %v1379 = vmul.f32 %v901, %v1366
      %v1389 = vrot.slane %v1371, 2
      %v1390 = vrot.slane %v1374, 2
      %v1391 = vsel %vm991, %v1389, %v1390
      %v1392 = vrot.slane %v1372, 2
      %v1393 = vrot.slane %v1375, 2
      %v1394 = vsel %vm991, %v1392, %v1393
      %v1395 = vrot.slane %v1373, 2
      %v1396 = vrot.slane %v1376, 2
      %v1397 = vsel %vm991, %v1395, %v1396
      %v1398 = vrot.slane %v1377, 2
      %v1399 = vsel %vm991, %v1390, %v1398
      %v1400 = vrot.slane %v1378, 2
      %v1401 = vsel %vm991, %v1393, %v1400
      %v1402 = vrot.slane %v1379, 2
      %v1403 = vsel %vm991, %v1396, %v1402
      %1404 = vrot.lane.b32.xlu0 %v1391, 96
      %v1405 = vpop.permute.xlu0 %1404
      %1406 = vrot.lane.b32.xlu0 %v1394, 96
      %v1407 = vpop.permute.xlu0 %1406
      %1408 = vrot.lane.b32.xlu0 %v1397, 96
      %v1409 = vpop.permute.xlu0 %1408
      %1410 = vrot.lane.b32.xlu0 %v1399, 96
      %v1411 = vpop.permute.xlu0 %1410
      %1412 = vrot.lane.b32.xlu0 %v1401, 96
      %v1413 = vpop.permute.xlu0 %1412
      %1414 = vrot.lane.b32.xlu0 %v1403, 96
      %v1415 = vpop.permute.xlu0 %1414
      %v1416 = vsel %vm1263, %v1405, %v1407
      %v1417 = vsel %vm1263, %v1407, %v1409
      %v1418 = vsel %vm1263, %v1411, %v1413
      %v1419 = vsel %vm1263, %v1413, %v1415
      %v1424 = vadd.f32 %v1348, %v1416
      %v1425 = vadd.f32 %v1349, %v1417
      %v1426 = vadd.f32 %v1350, %v1418
      %v1427 = vadd.f32 %v1351, %v1419
      %v1428 = vld [vmem:[%s5] sm:$0x3]
      %v1430 = vlaneseq
      %v1431 = vshrl.u32 %v1430, 7
      %v1432 = vsub.s32 0, %v1431
      %v1433 = vrot.slane %v1428, %v1432
      %v1434 = vlaneseq
      %v1435 = vshrl.u32 %v1434, 7
      %v1436 = vsub.s32 1, %v1435
      %v1437 = vrot.slane %v1428, %v1436
      %v1440 = vmul.f32 %v1424, %v1433
      %v1441 = vmul.f32 %v1425, %v1437
      %v1442 = vmul.f32 %v1426, %v1433
      %v1443 = vmul.f32 %v1427, %v1437
      %v1444 = vld [vmem:[%s6] sm:$0x3]
      %v1446 = vlaneseq
      %v1447 = vshrl.u32 %v1446, 7
      %v1448 = vsub.s32 0, %v1447
      %v1449 = vrot.slane %v1444, %v1448
      %v1450 = vlaneseq
      %v1451 = vshrl.u32 %v1450, 7
      %v1452 = vsub.s32 1, %v1451
      %v1453 = vrot.slane %v1444, %v1452
      %v1456 = vadd.f32 %v1440, %v1449
      %v1457 = vadd.f32 %v1441, %v1453
      %v1458 = vadd.f32 %v1442, %v1449
      %v1459 = vadd.f32 %v1443, %v1453
      %v1460 = vmax.f32 %v1456, 0.0
      %v1461 = vmax.f32 %v1457, 0.0
      %v1462 = vmax.f32 %v1458, 0.0
      %v1463 = vmax.f32 %v1459, 0.0
      %v1464 = vpack.c.bf16 %v1462, %v1460
      %v1465 = vpack.c.bf16 %v1463, %v1461
      %v1466 = vld [vmem:[%s7] sm:$0xf]
      %v1467 = vld [vmem:[%s7 + $0x4] sm:$0xf]
      %v1468 = vld [vmem:[%s7 + $0x8] sm:$0xf]
      %v1469 = vld [vmem:[%s7 + $0xc] sm:$0xf]
      %v1470 = vld [vmem:[%s7 + $0x10] sm:$0xf]
      %v1471 = vld [vmem:[%s7 + $0x14] sm:$0xf]
      %v1472 = vld [vmem:[%s7 + $0x18] sm:$0xf]
      %v1473 = vld [vmem:[%s7 + $0x1c] sm:$0xf]
      %v1474 = vld [vmem:[%s7 + $0x20] sm:$0xf]
      %v1475 = vld [vmem:[%s7 + $0x24] sm:$0xf]
      %v1476 = vld [vmem:[%s7 + $0x28] sm:$0xf]
      %v1477 = vld [vmem:[%s7 + $0x2c] sm:$0xf]
      %v1478 = vld [vmem:[%s7 + $0x30] sm:$0xf]
      %v1479 = vld [vmem:[%s7 + $0x34] sm:$0xf]
      %v1480 = vld [vmem:[%s7 + $0x38] sm:$0xf]
      %v1481 = vld [vmem:[%s7 + $0x3c] sm:$0xf]
      %v1482 = vld [vmem:[%s7 + $0x40] sm:$0xf]
      %v1483 = vld [vmem:[%s7 + $0x44] sm:$0xf]
      %v1484 = vld [vmem:[%s7 + $0x48] sm:$0xf]
      %v1485 = vld [vmem:[%s7 + $0x4c] sm:$0xf]
      %v1486 = vld [vmem:[%s7 + $0x50] sm:$0xf]
      %v1487 = vld [vmem:[%s7 + $0x54] sm:$0xf]
      %v1488 = vld [vmem:[%s7 + $0x58] sm:$0xf]
      %v1489 = vld [vmem:[%s7 + $0x5c] sm:$0xf]
      %v1490 = vld [vmem:[%s7 + $0x60] sm:$0xf]
      %v1491 = vld [vmem:[%s7 + $0x64] sm:$0xf]
      %v1492 = vld [vmem:[%s7 + $0x68] sm:$0xf]
      %v1493 = vld [vmem:[%s7 + $0x6c] sm:$0xf]
      %v1494 = vld [vmem:[%s7 + $0x70] sm:$0xf]
      %v1495 = vld [vmem:[%s7 + $0x74] sm:$0xf]
      %v1496 = vld [vmem:[%s7 + $0x78] sm:$0xf]
      %v1497 = vld [vmem:[%s7 + $0x7c] sm:$0xf]
      %v1530 = vunpack.c.l.b16 %v1466
      %v1531 = vunpack.c.l.b16 %v1467
      %v1532 = vunpack.c.l.b16 %v1468
      %v1533 = vunpack.c.l.b16 %v1469
      %v1534 = vunpack.c.l.b16 %v1470
      %v1535 = vunpack.c.l.b16 %v1471
      %v1536 = vunpack.c.l.b16 %v1472
      %v1537 = vunpack.c.l.b16 %v1473
      %v1538 = vunpack.c.l.b16 %v1474
      %v1539 = vunpack.c.l.b16 %v1475
      %v1540 = vunpack.c.l.b16 %v1476
      %v1541 = vunpack.c.l.b16 %v1477
      %v1542 = vunpack.c.l.b16 %v1478
      %v1543 = vunpack.c.l.b16 %v1479
      %v1544 = vunpack.c.l.b16 %v1480
      %v1545 = vunpack.c.l.b16 %v1481
      %v1546 = vunpack.c.l.b16 %v1482
      %v1547 = vunpack.c.l.b16 %v1483
      %v1548 = vunpack.c.l.b16 %v1484
      %v1549 = vunpack.c.l.b16 %v1485
      %v1550 = vunpack.c.l.b16 %v1486
      %v1551 = vunpack.c.l.b16 %v1487
      %v1552 = vunpack.c.l.b16 %v1488
      %v1553 = vunpack.c.l.b16 %v1489
      %v1554 = vunpack.c.l.b16 %v1490
      %v1555 = vunpack.c.l.b16 %v1491
      %v1556 = vunpack.c.l.b16 %v1492
      %v1557 = vunpack.c.l.b16 %v1493
      %v1558 = vunpack.c.l.b16 %v1494
      %v1559 = vunpack.c.l.b16 %v1495
      %v1560 = vunpack.c.l.b16 %v1496
      %v1561 = vunpack.c.l.b16 %v1497
      %v1562 = vpack.c.b16 %v1531, %v1530
      %v1563 = vpack.c.b16 %v1533, %v1532
      %v1564 = vpack.c.b16 %v1535, %v1534
      %v1565 = vpack.c.b16 %v1537, %v1536
      %v1566 = vpack.c.b16 %v1539, %v1538
      %v1567 = vpack.c.b16 %v1541, %v1540
      %v1568 = vpack.c.b16 %v1543, %v1542
      %v1569 = vpack.c.b16 %v1545, %v1544
      %v1570 = vpack.c.b16 %v1547, %v1546
      %v1571 = vpack.c.b16 %v1549, %v1548
      %v1572 = vpack.c.b16 %v1551, %v1550
      %v1573 = vpack.c.b16 %v1553, %v1552
      %v1574 = vpack.c.b16 %v1555, %v1554
      %v1575 = vpack.c.b16 %v1557, %v1556
      %v1576 = vpack.c.b16 %v1559, %v1558
      %v1577 = vpack.c.b16 %v1561, %v1560
      %1594 = vmatprep.subr.bf16.mxu0 0
      %1595 = vmatpush1.bf16.msra.mxu0 %v1569
      %1596 = vmatprep.subr.bf16.mxu0 0
      %1597 = vmatpush1.bf16.msra.mxu0 %v1568
      %1598 = vmatprep.subr.bf16.mxu0 0
      %1599 = vmatpush1.bf16.msra.mxu0 %v1567
      %1600 = vmatprep.subr.bf16.mxu0 0
      %1601 = vmatpush1.bf16.msra.mxu0 %v1566
      %1602 = vmatprep.subr.bf16.mxu0 0
      %1603 = vmatpush1.bf16.msra.mxu0 %v1565
      %1604 = vmatprep.subr.bf16.mxu0 0
      %1605 = vmatpush1.bf16.msra.mxu0 %v1564
      %1606 = vmatprep.subr.bf16.mxu0 0
      %1607 = vmatpush1.bf16.msra.mxu0 %v1563
      %1608 = vmatprep.subr.bf16.mxu0 0
      %1609 = vmatpush1.bf16.msra.mxu0 %v1562
      %1610 = vmatprep.subr.bf16.mxu0 0
      %1611 = vmatpush2.bf16.msra.mxu0 %v1577
      %1612 = vmatprep.subr.bf16.mxu0 0
      %1613 = vmatpush2.bf16.msra.mxu0 %v1576
      %1614 = vmatprep.subr.bf16.mxu0 0
      %1615 = vmatpush2.bf16.msra.mxu0 %v1575
      %1616 = vmatprep.subr.bf16.mxu0 0
      %1617 = vmatpush2.bf16.msra.mxu0 %v1574
      %1618 = vmatprep.subr.bf16.mxu0 0
      %1619 = vmatpush2.bf16.msra.mxu0 %v1573
      %1620 = vmatprep.subr.bf16.mxu0 0
      %1621 = vmatpush2.bf16.msra.mxu0 %v1572
      %1622 = vmatprep.subr.bf16.mxu0 0
      %1623 = vmatpush2.bf16.msra.mxu0 %v1571
      %1624 = vmatprep.subr.bf16.mxu0 0
      %1625 = vmatpush2.bf16.msra.mxu0 %v1570
      %1626 = vmatprep.mubr.bf16.mxu0 %v1465
      %1627 = vmatmul.mubr.bf16.gmra.mxu0 %v1464
      %v1628 = vpop.f32.mrf.mxu0
      %v1629 = vadd.f32 0.0, %v1628
      %v1630 = vpop.f32.mrf.mxu0
      %v1631 = vpop.f32.mrf.mxu0
      %v1632 = vadd.f32 0.0, %v1631
      %v1633 = vpop.f32.mrf.mxu0
      %1634 = vdwg.mxu0
      %v1635 = vld [vmem:[%s8] sm:$0x1]
      %v1637 = vlaneseq
      %v1638 = vshrl.u32 %v1637, 7
      %v1639 = vsub.s32 0, %v1638
      %v1640 = vrot.slane %v1635, %v1639
      %v1642 = vmul.f32 %v1629, %v1640
      %v1643 = vmul.f32 %v1632, %v1640
      %v1644 = vld [vmem:[%s9] sm:$0x1]
      %v1646 = vlaneseq
      %v1647 = vshrl.u32 %v1646, 7
      %v1648 = vsub.s32 0, %v1647
      %v1649 = vrot.slane %v1644, %v1648
      %v1651 = vadd.f32 %v1642, %v1649
      %v1652 = vadd.f32 %v1643, %v1649
      %v1653 = vld [vmem:[%s434] sm:$0xff]
      %v1654 = vld [vmem:[%s434 + $0x8] sm:$0xff]
      %v1655 = vadd.f32 %v1651, %v1653
      %v1656 = vadd.f32 %v1652, %v1654
      %1657 = vst [vmem:[%s444] sm:$0xff] %v1655
      %1658 = vst [vmem:[%s444 + $0x8] sm:$0xff] %v1656
      %s1659 = smul.u32 2, %s27
      %p1660 = scmp.lt.s32.totalorder %s26, 1
      %s1661 = scalar_select %p1660, %s26, 1
      %p1662 = scmp.lt.s32.totalorder %s1659, 1
      %s1663 = scalar_select %p1662, %s1659, 1
      %s1664 = smul.addr %s1661, 2
      %s1665 = sadd.s32 %s1663, %s1664
      %s1666 = smul.addr %s1665, 8
      %s1667 = scalar_lea.vmem %s11, %s1666
      // Predicated region
      $region65: #{block_forward.1} parent=63 // pred_check
        %p1668 = pneg %p297
      $region66: #{block_forward.1} parent=63 // pred_check_branch
        %1670 = sbr.rel (%p1668) target = $region68
      $region67: #{block_forward.1} parent=63 // pred_region
        %s1671 = smul.u32 2, %s27
      $region68: #{block_forward.1} parent=63 // pred_fallthru
        _
    $region64: #{block_forward.1} parent=5 // pred_fallthru
      _
    %p1672 = scmp.le.s32.totalorder 2, %s17
    // Predicated region
    $region69: #{block_forward.1} parent=5 // pred_check
      %p1673 = pneg %p1672
    $region70: #{block_forward.1} parent=5 // pred_check_branch
      %1675 = sbr.rel (%p1673) target = $region72
    $region71: #{block_forward.1} parent=5 // pred_region
      %s1676 = ssub.s32 %s17, 2
      // Predicated region
      $region73: #{block_forward.1} parent=71 // pred_check
        %p1677 = pneg %p303
      $region74: #{block_forward.1} parent=71 // pred_check_branch
        %1679 = sbr.rel (%p1677) target = $region76
      $region75: #{block_forward.1} parent=71 // pred_region
        %s1680 = smul.u32 2, %s29
        %p1681 = scmp.lt.s32.totalorder %s28, 1
        %s1682 = scalar_select %p1681, %s28, 1
        %p1683 = scmp.lt.s32.totalorder %s1680, 1
        %s1684 = scalar_select %p1683, %s1680, 1
        %s1685 = smul.addr %s1682, 2
        %s1686 = sadd.s32 %s1684, %s1685
        %s1687 = smul.addr %s1686, 8
        %s1688 = scalar_lea.vmem %s11, %s1687
      $region76: #{block_forward.1} parent=71 // pred_fallthru
        _
    $region72: #{block_forward.1} parent=5 // pred_fallthru
      _
  $region6: #{block_forward.1} parent=0 // loop_footer
    %s21 = sadd.s32 1, %s17
  $region7: #{block_forward.1} parent=0 // loop_footer_branch
    %16 = sbr.rel target = $region3
  $region8: #{block_forward.1} parent=0 // loop_exit
    _

</llo_original>
